<compile_context>
chip_gen: v7x
topology: tpu7x:2x2x1
jax: 0.10.0
libtpu: 0.0.40
codegen_flags: <defaults>
</compile_context>

<pallas_src>
import math

import jax
import jax.numpy as jnp
from jax.experimental import pallas as pl
from jax.experimental.pallas import tpu as pltpu


# -----------------------------------------------------------------------------
# Pallas kernel: the whole TransformerBlock stack (grid axis = layer index)
# -----------------------------------------------------------------------------
def _encoder_stack_kernel(x_ref, wq_ref, wk_ref, wv_ref,
                          g1_ref, be1_ref,
                          w1_ref, bb1_ref, w2_ref, bb2_ref,
                          g2_ref, be2_ref,
                          out_ref, act_ref):
    B, S, E = out_ref.shape
    layer = pl.program_id(0)

    # Layer 0: seed the carried activation (persistent VMEM scratch) with input.
    @pl.when(layer == 0)
    def _():
        act_ref[...] = x_ref[...].reshape(B * S, E)

    x2d = act_ref[...]                                   # f32 (B*S, E), carried
    x_bf = x2d.astype(jnp.bfloat16)

    # --- SelfAttention (single head, no QKV bias, no output projection) ------
    scale = 1.0 / math.sqrt(E)
    q = (jnp.dot(x_bf, wq_ref[...], preferred_element_type=jnp.float32)
         * scale).reshape(B, S, E)
    k = jnp.dot(x_bf, wk_ref[...],
                preferred_element_type=jnp.float32).reshape(B, S, E)
    v = jnp.dot(x_bf, wv_ref[...],
                preferred_element_type=jnp.float32).reshape(B, S, E)

    # batched contraction over the last dim of both operands — no k.T needed
    scores = jnp.einsum('bqe,bke->bqk',
                        q.astype(jnp.bfloat16), k.astype(jnp.bfloat16),
                        preferred_element_type=jnp.float32)              # (B,S,S)
    scores = scores - jnp.max(scores, axis=-1, keepdims=True)            # f32 softmax
    p = jnp.exp(scores)
    attn = p * pl.reciprocal(jnp.sum(p, axis=-1, keepdims=True), approx=True)
    attn_out = jnp.einsum('bqk,bke->bqe',
                          attn.astype(jnp.bfloat16), v.astype(jnp.bfloat16),
                          preferred_element_type=jnp.float32)            # (B,S,E)
    attn_out = attn_out.reshape(B * S, E)

    def layer_norm(y, gamma, beta):
        mu = jnp.mean(y, axis=-1, keepdims=True)
        var = jnp.mean((y - mu) ** 2, axis=-1, keepdims=True)            # biased, as torch
        return (y - mu) * jax.lax.rsqrt(var + 1e-5) * gamma + beta

    # --- residual + norm1 (dropout == identity) ------------------------------
    h1 = layer_norm(attn_out + x2d, g1_ref[...], be1_ref[...])           # (B*S, E)

    # --- feed forward (Linear -> ReLU -> Linear, biases) ----------------------
    ff = jnp.dot(h1.astype(jnp.bfloat16), w1_ref[...],
                 preferred_element_type=jnp.float32) + bb1_ref[...]
    ff = jnp.maximum(ff, 0.0)
    ff = jnp.dot(ff.astype(jnp.bfloat16), w2_ref[...],
                 preferred_element_type=jnp.float32) + bb2_ref[...]

    # --- residual + norm2 (dropout == identity) ------------------------------
    act_ref[...] = layer_norm(ff + h1, g2_ref[...], be2_ref[...])

    # Finalize: write the HBM output block only once, after the last layer.
    @pl.when(layer == pl.num_programs(0) - 1)
    def _():
        out_ref[...] = act_ref[...].reshape(B, S, E).astype(out_ref.dtype)


def encoder_stack(x, stacked):
    """x: (B, S, E) float32 embeddings; stacked: dict of weights with leading layer axis L."""
    B, S, E = x.shape
    L = stacked["wq"].shape[0]
    H = stacked["w1"].shape[2]

    # matmul weights go to the MXU in bf16 — convert once, outside the kernel
    wq = stacked["wq"].astype(jnp.bfloat16)
    wk = stacked["wk"].astype(jnp.bfloat16)
    wv = stacked["wv"].astype(jnp.bfloat16)
    w1 = stacked["w1"].astype(jnp.bfloat16)
    w2 = stacked["w2"].astype(jnp.bfloat16)

    full = pl.BlockSpec((B, S, E), lambda l: (0, 0, 0))          # resident across layers
    w_ee = pl.BlockSpec((None, E, E), lambda l: (l, 0, 0))       # per-layer, pipelined
    vec_e = pl.BlockSpec((None, 1, E), lambda l: (l, 0, 0))
    w_eh = pl.BlockSpec((None, E, H), lambda l: (l, 0, 0))
    vec_h = pl.BlockSpec((None, 1, H), lambda l: (l, 0, 0))
    w_he = pl.BlockSpec((None, H, E), lambda l: (l, 0, 0))

    weight_bytes = (wq.size + wk.size + wv.size + w1.size + w2.size) * 2
    vec_bytes = sum(int(stacked[n].size) * 4
                    for n in ("g1", "be1", "bb1", "bb2", "g2", "be2"))
    flops = 2 * L * B * S * (3 * E * E + 2 * S * E + 2 * E * H)
    cost = pl.CostEstimate(flops=flops,
                           transcendentals=L * B * S * S,
                           bytes_accessed=weight_bytes + vec_bytes + 2 * B * S * E * 4)

    return pl.pallas_call(
        _encoder_stack_kernel,
        out_shape=jax.ShapeDtypeStruct((B, S, E), jnp.float32),
        grid_spec=pltpu.PrefetchScalarGridSpec(
            num_scalar_prefetch=0,
            grid=(L,),
            in_specs=[full,
                      w_ee, w_ee, w_ee,          # Wq, Wk, Wv
                      vec_e, vec_e,              # norm1 gamma, beta
                      w_eh, vec_h, w_he, vec_e,  # ffn W1, b1, W2, b2
                      vec_e, vec_e],             # norm2 gamma, beta
            out_specs=full,
            scratch_shapes=[pltpu.VMEM((B * S, E), jnp.float32)],   # carried activation
        ),
        compiler_params=pltpu.CompilerParams(
            dimension_semantics=("arbitrary",),      # layers are sequential (carry)
            vmem_limit_bytes=48 * 1024 * 1024),      # fits v7x's 64 MiB VMEM
        cost_estimate=cost,
    )(x,
      wq, wk, wv,
      stacked["g1"], stacked["be1"],
      w1, stacked["bb1"], w2, stacked["bb2"],
      stacked["g2"], stacked["be2"])


# -----------------------------------------------------------------------------
# Encoder: embedding + positional encoding (JAX glue) + fused Pallas stack
# -----------------------------------------------------------------------------
def positional_encoding(max_len, d_model):
    position = jnp.arange(max_len, dtype=jnp.float32)[:, None]
    div_term = jnp.exp(jnp.arange(0, d_model, 2, dtype=jnp.float32)
                       * -(math.log(10000.0) / d_model))
    pe = jnp.zeros((max_len, d_model), dtype=jnp.float32)
    pe = pe.at[:, 0::2].set(jnp.sin(position * div_term))
    pe = pe.at[:, 1::2].set(jnp.cos(position * div_term))
    return pe  # (max_len, d_model)


def init_encoder_params(key, src_vocab_size, embed_size, forward_expansion, num_layers):
    H = embed_size * forward_expansion
    keys = jax.random.split(key, 1 + num_layers * 7)
    params = {"embedding": jax.random.normal(keys[0], (src_vocab_size, embed_size),
                                             dtype=jnp.float32)}
    s = 1.0 / math.sqrt(embed_size)
    sh = 1.0 / math.sqrt(H)
    acc = {name: [] for name in
           ("wq", "wk", "wv", "g1", "be1", "w1", "bb1", "w2", "bb2", "g2", "be2")}
    ki = 1
    for _ in range(num_layers):
        acc["wq"].append(jax.random.uniform(keys[ki + 0], (embed_size, embed_size), jnp.float32, -s, s))
        acc["wk"].append(jax.random.uniform(keys[ki + 1], (embed_size, embed_size), jnp.float32, -s, s))
        acc["wv"].append(jax.random.uniform(keys[ki + 2], (embed_size, embed_size), jnp.float32, -s, s))
        acc["g1"].append(jnp.ones((1, embed_size), jnp.float32))
        acc["be1"].append(jnp.zeros((1, embed_size), jnp.float32))
        acc["w1"].append(jax.random.uniform(keys[ki + 3], (embed_size, H), jnp.float32, -s, s))
        acc["bb1"].append(jax.random.uniform(keys[ki + 4], (1, H), jnp.float32, -s, s))
        acc["w2"].append(jax.random.uniform(keys[ki + 5], (H, embed_size), jnp.float32, -sh, sh))
        acc["bb2"].append(jax.random.uniform(keys[ki + 6], (1, embed_size), jnp.float32, -sh, sh))
        acc["g2"].append(jnp.ones((1, embed_size), jnp.float32))
        acc["be2"].append(jnp.zeros((1, embed_size), jnp.float32))
        ki += 7
    params["stacked"] = {k: jnp.stack(v, axis=0) for k, v in acc.items()}
    return params


@jax.jit
def encoder_forward(params, src, pe):
    # embedding lookup (gather) + positional encoding: plain-JAX glue
    embed = params["embedding"][src]                      # (B, S, E)
    embed = embed + pe[None, :src.shape[1], :]
    # classification=False path: return the encoded sequence
    return encoder_stack(embed, params["stacked"])        # one fused Pallas call


# pure-JAX f32 reference for a sanity check
def encoder_reference(params, src, pe):
    x = params["embedding"][src] + pe[None, :src.shape[1], :]
    st = params["stacked"]

    def ln(y, g, b):
        mu = y.mean(-1, keepdims=True)
        var = ((y - mu) ** 2).mean(-1, keepdims=True)
        return (y - mu) * jax.lax.rsqrt(var + 1e-5) * g + b

    L = st["wq"].shape[0]
    for l in range(L):
        q = x @ st["wq"][l]
        k = x @ st["wk"][l]
        v = x @ st["wv"][l]
        sc = jnp.einsum('bqe,bke->bqk', q, k) / math.sqrt(x.shape[-1])
        a = jax.nn.softmax(sc, axis=-1)
        ao = jnp.einsum('bqk,bke->bqe', a, v)
        h1 = ln(ao + x, st["g1"][l], st["be1"][l])
        ff = jnp.maximum(h1 @ st["w1"][l] + st["bb1"][l], 0.0)
        ff = ff @ st["w2"][l] + st["bb2"][l]
        x = ln(ff + h1, st["g2"][l], st["be2"][l])
    return x


# -----------------------------------------------------------------------------
if __name__ == "__main__":
    # small, module-consistent shapes
    B, S = 2, 8
    src_vocab_size = 100
    embed_size = 32
    forward_expansion = 4
    num_layers = 2

    key = jax.random.PRNGKey(0)
    k_params, k_src = jax.random.split(key)

    params = init_encoder_params(k_params, src_vocab_size, embed_size,
                                 forward_expansion, num_layers)
    src = jax.random.randint(k_src, (B, S), 0, src_vocab_size, dtype=jnp.int32)
    pe = positional_encoding(max_len=64, d_model=embed_size)

    out = encoder_forward(params, src, pe)
    jax.block_until_ready(out)
    assert out.shape == (B, S, embed_size)
    assert bool(jnp.all(jnp.isfinite(out)))

    # loose tolerance: Pallas path uses bf16 MXU operands (f32 accumulation)
    ref = encoder_reference(params, src, pe)
    max_err = float(jnp.max(jnp.abs(out - ref)))
    assert max_err < 0.25, f"max abs error vs f32 reference: {max_err}"

    print("KERNEL_OK")
</pallas_src>

<mosaic_0001>
module attributes {stable_mosaic.version = 11 : i64} {
  func.func @_encoder_stack_kernel(%arg0: i32, %arg1: memref<2x8x32xf32, #tpu.memory_space<vmem>>, %arg2: memref<1x32x32xbf16, #tpu.memory_space<vmem>>, %arg3: memref<1x32x32xbf16, #tpu.memory_space<vmem>>, %arg4: memref<1x32x32xbf16, #tpu.memory_space<vmem>>, %arg5: memref<1x1x32xf32, #tpu.memory_space<vmem>>, %arg6: memref<1x1x32xf32, #tpu.memory_space<vmem>>, %arg7: memref<1x32x128xbf16, #tpu.memory_space<vmem>>, %arg8: memref<1x1x128xf32, #tpu.memory_space<vmem>>, %arg9: memref<1x128x32xbf16, #tpu.memory_space<vmem>>, %arg10: memref<1x1x32xf32, #tpu.memory_space<vmem>>, %arg11: memref<1x1x32xf32, #tpu.memory_space<vmem>>, %arg12: memref<1x1x32xf32, #tpu.memory_space<vmem>>, %arg13: memref<2x8x32xf32, #tpu.memory_space<vmem>>, %arg14: memref<16x32xf32, #tpu.memory_space<vmem>>) attributes {dimension_semantics = [#tpu.dimension_semantics<arbitrary>], iteration_bounds = array<i64: 2>, scalar_prefetch = 0 : i64, scratch_operands = 1 : i64, tpu.core_type = #tpu.core_type<tc>, window_params = [{pipeline_mode = #tpu.pipeline_mode<synchronous>, transform_indices = @transform_0, window_bounds = array<i64: 2, 8, 32>}, {transform_indices = @transform_1, window_bounds = array<i64: 1, 32, 32>}, {transform_indices = @transform_2, window_bounds = array<i64: 1, 32, 32>}, {transform_indices = @transform_3, window_bounds = array<i64: 1, 32, 32>}, {transform_indices = @transform_4, window_bounds = array<i64: 1, 1, 32>}, {transform_indices = @transform_5, window_bounds = array<i64: 1, 1, 32>}, {transform_indices = @transform_6, window_bounds = array<i64: 1, 32, 128>}, {transform_indices = @transform_7, window_bounds = array<i64: 1, 1, 128>}, {transform_indices = @transform_8, window_bounds = array<i64: 1, 128, 32>}, {transform_indices = @transform_9, window_bounds = array<i64: 1, 1, 32>}, {transform_indices = @transform_10, window_bounds = array<i64: 1, 1, 32>}, {transform_indices = @transform_11, window_bounds = array<i64: 1, 1, 32>}, {pipeline_mode = #tpu.pipeline_mode<synchronous>, transform_indices = @transform_12, window_bounds = array<i64: 2, 8, 32>}]} {
    %c0_i32 = arith.constant 0 : i32
    %0 = arith.cmpi eq, %arg0, %c0_i32 : i32
    %1 = arith.extui %0 : i1 to i32
    %c0_i32_0 = arith.constant 0 : i32
    %2 = arith.cmpi ne, %1, %c0_i32_0 : i32
    scf.if %2 {
      %c0_58 = arith.constant 0 : index
      %c0_59 = arith.constant 0 : index
      %c0_60 = arith.constant 0 : index
      %112 = vector.load %arg1[%c0_58, %c0_59, %c0_60] : memref<2x8x32xf32, #tpu.memory_space<vmem>>, vector<2x8x32xf32>
      %113 = vector.shape_cast %112 : vector<2x8x32xf32> to vector<16x32xf32>
      %c0_61 = arith.constant 0 : index
      %c0_62 = arith.constant 0 : index
      %114 = vector.load %arg14[%c0_61, %c0_62] : memref<16x32xf32, #tpu.memory_space<vmem>>, vector<16x32xf32>
      tpu.vector_store %arg14[%c0_61, %c0_62], %113 {strides = array<i32>} : memref<16x32xf32, #tpu.memory_space<vmem>>, vector<16x32xf32>,
    } else {
    }
    %c0 = arith.constant 0 : index
    %c0_1 = arith.constant 0 : index
    %3 = vector.load %arg14[%c0, %c0_1] : memref<16x32xf32, #tpu.memory_space<vmem>>, vector<16x32xf32>
    %4 = arith.truncf %3 : vector<16x32xf32> to vector<16x32xbf16>
    %c0_2 = arith.constant 0 : index
    %c0_3 = arith.constant 0 : index
    %c0_4 = arith.constant 0 : index
    %5 = vector.load %arg2[%c0_2, %c0_3, %c0_4] : memref<1x32x32xbf16, #tpu.memory_space<vmem>>, vector<1x32x32xbf16>
    %6 = vector.shape_cast %5 : vector<1x32x32xbf16> to vector<32x32xbf16>
    %cst = arith.constant dense<0.000000e+00> : vector<16x32xf32>
    %7 = tpu.matmul %4, %6, %cst {dimension_numbers = #tpu.dot_dimension_numbers<[1], [0], [0], [1], [0, 0, 1, 1], [], []>} : vector<16x32xbf16>, vector<32x32xbf16>, vector<16x32xf32> -> vector<16x32xf32>
    %cst_5 = arith.constant 0.176776692 : f32
    %8 = vector.broadcast %cst_5 : f32 to vector<16x32xf32>
    %9 = arith.mulf %7, %8 : vector<16x32xf32>
    %10 = vector.shape_cast %9 : vector<16x32xf32> to vector<2x8x32xf32>
    %c0_6 = arith.constant 0 : index
    %c0_7 = arith.constant 0 : index
    %c0_8 = arith.constant 0 : index
    %11 = vector.load %arg3[%c0_6, %c0_7, %c0_8] : memref<1x32x32xbf16, #tpu.memory_space<vmem>>, vector<1x32x32xbf16>
    %12 = vector.shape_cast %11 : vector<1x32x32xbf16> to vector<32x32xbf16>
    %cst_9 = arith.constant dense<0.000000e+00> : vector<16x32xf32>
    %13 = tpu.matmul %4, %12, %cst_9 {dimension_numbers = #tpu.dot_dimension_numbers<[1], [0], [0], [1], [0, 0, 1, 1], [], []>} : vector<16x32xbf16>, vector<32x32xbf16>, vector<16x32xf32> -> vector<16x32xf32>
    %14 = vector.shape_cast %13 : vector<16x32xf32> to vector<2x8x32xf32>
    %c0_10 = arith.constant 0 : index
    %c0_11 = arith.constant 0 : index
    %c0_12 = arith.constant 0 : index
    %15 = vector.load %arg4[%c0_10, %c0_11, %c0_12] : memref<1x32x32xbf16, #tpu.memory_space<vmem>>, vector<1x32x32xbf16>
    %16 = vector.shape_cast %15 : vector<1x32x32xbf16> to vector<32x32xbf16>
    %cst_13 = arith.constant dense<0.000000e+00> : vector<16x32xf32>
    %17 = tpu.matmul %4, %16, %cst_13 {dimension_numbers = #tpu.dot_dimension_numbers<[1], [0], [0], [1], [0, 0, 1, 1], [], []>} : vector<16x32xbf16>, vector<32x32xbf16>, vector<16x32xf32> -> vector<16x32xf32>
    %18 = vector.shape_cast %17 : vector<16x32xf32> to vector<2x8x32xf32>
    %19 = arith.truncf %10 : vector<2x8x32xf32> to vector<2x8x32xbf16>
    %20 = arith.truncf %14 : vector<2x8x32xf32> to vector<2x8x32xbf16>
    "tpu.trace_start"() <{level = 10 : i32, message = "bqe,bke->bqk"}> : () -> ()
    %cst_14 = arith.constant dense<0.000000e+00> : vector<2x8x8xf32>
    %21 = tpu.matmul %19, %20, %cst_14 {dimension_numbers = #tpu.dot_dimension_numbers<[2], [2], [1], [1], [0, 0, 0, 1, 1, 1], [0], [0]>} : vector<2x8x32xbf16>, vector<2x8x32xbf16>, vector<2x8x8xf32> -> vector<2x8x8xf32>
    "tpu.trace_stop"() : () -> ()
    %cst_15 = arith.constant dense<0xFF800000> : vector<2x8xf32>
    %22 = vector.multi_reduction <maximumf>, %21, %cst_15 [2] : vector<2x8x8xf32> to vector<2x8xf32>
    %23 = vector.shape_cast %22 : vector<2x8xf32> to vector<2x8x1xf32>
    %24 = vector.broadcast %23 : vector<2x8x1xf32> to vector<2x8x8xf32>
    %25 = arith.subf %21, %24 : vector<2x8x8xf32>
    %26 = math.exp %25 : vector<2x8x8xf32>
    %cst_16 = arith.constant dense<0.000000e+00> : vector<2x8xf32>
    %27 = vector.multi_reduction <add>, %26, %cst_16 [2] : vector<2x8x8xf32> to vector<2x8xf32>
    %28 = vector.shape_cast %27 : vector<2x8xf32> to vector<2x8x1xf32>
    %29 = tpu.reciprocal %28 {approx = true} : vector<2x8x1xf32> -> vector<2x8x1xf32>
    %30 = vector.broadcast %29 : vector<2x8x1xf32> to vector<2x8x8xf32>
    %31 = arith.mulf %26, %30 : vector<2x8x8xf32>
    %32 = arith.truncf %31 : vector<2x8x8xf32> to vector<2x8x8xbf16>
    %33 = arith.truncf %18 : vector<2x8x32xf32> to vector<2x8x32xbf16>
    "tpu.trace_start"() <{level = 10 : i32, message = "bqk,bke->bqe"}> : () -> ()
    %cst_17 = arith.constant dense<0.000000e+00> : vector<2x8x32xf32>
    %34 = tpu.matmul %32, %33, %cst_17 {dimension_numbers = #tpu.dot_dimension_numbers<[2], [1], [1], [2], [0, 0, 0, 1, 1, 2], [0], [0]>} : vector<2x8x8xbf16>, vector<2x8x32xbf16>, vector<2x8x32xf32> -> vector<2x8x32xf32>
    "tpu.trace_stop"() : () -> ()
    %35 = vector.shape_cast %34 : vector<2x8x32xf32> to vector<16x32xf32>
    %36 = arith.addf %35, %3 : vector<16x32xf32>
    %c0_18 = arith.constant 0 : index
    %c0_19 = arith.constant 0 : index
    %c0_20 = arith.constant 0 : index
    %37 = vector.load %arg5[%c0_18, %c0_19, %c0_20] : memref<1x1x32xf32, #tpu.memory_space<vmem>>, vector<1x1x32xf32>
    %38 = vector.shape_cast %37 : vector<1x1x32xf32> to vector<1x32xf32>
    %c0_21 = arith.constant 0 : index
    %c0_22 = arith.constant 0 : index
    %c0_23 = arith.constant 0 : index
    %39 = vector.load %arg6[%c0_21, %c0_22, %c0_23] : memref<1x1x32xf32, #tpu.memory_space<vmem>>, vector<1x1x32xf32>
    %40 = vector.shape_cast %39 : vector<1x1x32xf32> to vector<1x32xf32>
    %cst_24 = arith.constant dense<0.000000e+00> : vector<16xf32>
    %41 = vector.multi_reduction <add>, %36, %cst_24 [1] : vector<16x32xf32> to vector<16xf32>
    %42 = vector.shape_cast %41 : vector<16xf32> to vector<16x1xf32>
    %cst_25 = arith.constant 3.200000e+01 : f32
    %43 = vector.broadcast %cst_25 : f32 to vector<16x1xf32>
    %44 = arith.divf %42, %43 : vector<16x1xf32>
    %45 = vector.broadcast %44 : vector<16x1xf32> to vector<16x32xf32>
    %46 = arith.subf %36, %45 : vector<16x32xf32>
    %47 = arith.mulf %46, %46 : vector<16x32xf32>
    %cst_26 = arith.constant dense<0.000000e+00> : vector<16xf32>
    %48 = vector.multi_reduction <add>, %47, %cst_26 [1] : vector<16x32xf32> to vector<16xf32>
    %49 = vector.shape_cast %48 : vector<16xf32> to vector<16x1xf32>
    %cst_27 = arith.constant 3.200000e+01 : f32
    %50 = vector.broadcast %cst_27 : f32 to vector<16x1xf32>
    %51 = arith.divf %49, %50 : vector<16x1xf32>
    %52 = vector.broadcast %44 : vector<16x1xf32> to vector<16x32xf32>
    %53 = arith.subf %36, %52 : vector<16x32xf32>
    %cst_28 = arith.constant 9.99999974E-6 : f32
    %54 = vector.broadcast %cst_28 : f32 to vector<16x1xf32>
    %55 = arith.addf %51, %54 : vector<16x1xf32>
    %56 = math.rsqrt %55 : vector<16x1xf32>
    %57 = vector.broadcast %56 : vector<16x1xf32> to vector<16x32xf32>
    %58 = arith.mulf %53, %57 : vector<16x32xf32>
    %59 = vector.broadcast %38 : vector<1x32xf32> to vector<16x32xf32>
    %60 = arith.mulf %58, %59 : vector<16x32xf32>
    %61 = vector.broadcast %40 : vector<1x32xf32> to vector<16x32xf32>
    %62 = arith.addf %60, %61 : vector<16x32xf32>
    %63 = arith.truncf %62 : vector<16x32xf32> to vector<16x32xbf16>
    %c0_29 = arith.constant 0 : index
    %c0_30 = arith.constant 0 : index
    %c0_31 = arith.constant 0 : index
    %64 = vector.load %arg7[%c0_29, %c0_30, %c0_31] : memref<1x32x128xbf16, #tpu.memory_space<vmem>>, vector<1x32x128xbf16>
    %65 = vector.shape_cast %64 : vector<1x32x128xbf16> to vector<32x128xbf16>
    %cst_32 = arith.constant dense<0.000000e+00> : vector<16x128xf32>
    %66 = tpu.matmul %63, %65, %cst_32 {dimension_numbers = #tpu.dot_dimension_numbers<[1], [0], [0], [1], [0, 0, 1, 1], [], []>} : vector<16x32xbf16>, vector<32x128xbf16>, vector<16x128xf32> -> vector<16x128xf32>
    %c0_33 = arith.constant 0 : index
    %c0_34 = arith.constant 0 : index
    %c0_35 = arith.constant 0 : index
    %67 = vector.load %arg8[%c0_33, %c0_34, %c0_35] : memref<1x1x128xf32, #tpu.memory_space<vmem>>, vector<1x1x128xf32>
    %68 = vector.shape_cast %67 : vector<1x1x128xf32> to vector<1x128xf32>
    %69 = vector.broadcast %68 : vector<1x128xf32> to vector<16x128xf32>
    %70 = arith.addf %66, %69 : vector<16x128xf32>
    %cst_36 = arith.constant 0.000000e+00 : f32
    %71 = vector.broadcast %cst_36 : f32 to vector<16x128xf32>
    %72 = arith.maximumf %70, %71 : vector<16x128xf32>
    %73 = arith.truncf %72 : vector<16x128xf32> to vector<16x128xbf16>
    %c0_37 = arith.constant 0 : index
    %c0_38 = arith.constant 0 : index
    %c0_39 = arith.constant 0 : index
    %74 = vector.load %arg9[%c0_37, %c0_38, %c0_39] : memref<1x128x32xbf16, #tpu.memory_space<vmem>>, vector<1x128x32xbf16>
    %75 = vector.shape_cast %74 : vector<1x128x32xbf16> to vector<128x32xbf16>
    %cst_40 = arith.constant dense<0.000000e+00> : vector<16x32xf32>
    %76 = tpu.matmul %73, %75, %cst_40 {dimension_numbers = #tpu.dot_dimension_numbers<[1], [0], [0], [1], [0, 0, 1, 1], [], []>} : vector<16x128xbf16>, vector<128x32xbf16>, vector<16x32xf32> -> vector<16x32xf32>
    %c0_41 = arith.constant 0 : index
    %c0_42 = arith.constant 0 : index
    %c0_43 = arith.constant 0 : index
    %77 = vector.load %arg10[%c0_41, %c0_42, %c0_43] : memref<1x1x32xf32, #tpu.memory_space<vmem>>, vector<1x1x32xf32>
    %78 = vector.shape_cast %77 : vector<1x1x32xf32> to vector<1x32xf32>
    %79 = vector.broadcast %78 : vector<1x32xf32> to vector<16x32xf32>
    %80 = arith.addf %76, %79 : vector<16x32xf32>
    %81 = arith.addf %80, %62 : vector<16x32xf32>
    %c0_44 = arith.constant 0 : index
    %c0_45 = arith.constant 0 : index
    %c0_46 = arith.constant 0 : index
    %82 = vector.load %arg11[%c0_44, %c0_45, %c0_46] : memref<1x1x32xf32, #tpu.memory_space<vmem>>, vector<1x1x32xf32>
    %83 = vector.shape_cast %82 : vector<1x1x32xf32> to vector<1x32xf32>
    %c0_47 = arith.constant 0 : index
    %c0_48 = arith.constant 0 : index
    %c0_49 = arith.constant 0 : index
    %84 = vector.load %arg12[%c0_47, %c0_48, %c0_49] : memref<1x1x32xf32, #tpu.memory_space<vmem>>, vector<1x1x32xf32>
    %85 = vector.shape_cast %84 : vector<1x1x32xf32> to vector<1x32xf32>
    %cst_50 = arith.constant dense<0.000000e+00> : vector<16xf32>
    %86 = vector.multi_reduction <add>, %81, %cst_50 [1] : vector<16x32xf32> to vector<16xf32>
    %87 = vector.shape_cast %86 : vector<16xf32> to vector<16x1xf32>
    %cst_51 = arith.constant 3.200000e+01 : f32
    %88 = vector.broadcast %cst_51 : f32 to vector<16x1xf32>
    %89 = arith.divf %87, %88 : vector<16x1xf32>
    %90 = vector.broadcast %89 : vector<16x1xf32> to vector<16x32xf32>
    %91 = arith.subf %81, %90 : vector<16x32xf32>
    %92 = arith.mulf %91, %91 : vector<16x32xf32>
    %cst_52 = arith.constant dense<0.000000e+00> : vector<16xf32>
    %93 = vector.multi_reduction <add>, %92, %cst_52 [1] : vector<16x32xf32> to vector<16xf32>
    %94 = vector.shape_cast %93 : vector<16xf32> to vector<16x1xf32>
    %cst_53 = arith.constant 3.200000e+01 : f32
    %95 = vector.broadcast %cst_53 : f32 to vector<16x1xf32>
    %96 = arith.divf %94, %95 : vector<16x1xf32>
    %97 = vector.broadcast %89 : vector<16x1xf32> to vector<16x32xf32>
    %98 = arith.subf %81, %97 : vector<16x32xf32>
    %cst_54 = arith.constant 9.99999974E-6 : f32
    %99 = vector.broadcast %cst_54 : f32 to vector<16x1xf32>
    %100 = arith.addf %96, %99 : vector<16x1xf32>
    %101 = math.rsqrt %100 : vector<16x1xf32>
    %102 = vector.broadcast %101 : vector<16x1xf32> to vector<16x32xf32>
    %103 = arith.mulf %98, %102 : vector<16x32xf32>
    %104 = vector.broadcast %83 : vector<1x32xf32> to vector<16x32xf32>
    %105 = arith.mulf %103, %104 : vector<16x32xf32>
    %106 = vector.broadcast %85 : vector<1x32xf32> to vector<16x32xf32>
    %107 = arith.addf %105, %106 : vector<16x32xf32>
    %c0_55 = arith.constant 0 : index
    %c0_56 = arith.constant 0 : index
    %108 = vector.load %arg14[%c0_55, %c0_56] : memref<16x32xf32, #tpu.memory_space<vmem>>, vector<16x32xf32>
    tpu.vector_store %arg14[%c0_55, %c0_56], %107 {strides = array<i32>} : memref<16x32xf32, #tpu.memory_space<vmem>>, vector<16x32xf32>,
    %c1_i32 = arith.constant 1 : i32
    %109 = arith.cmpi eq, %arg0, %c1_i32 : i32
    %110 = arith.extui %109 : i1 to i32
    %c0_i32_57 = arith.constant 0 : i32
    %111 = arith.cmpi ne, %110, %c0_i32_57 : i32
    scf.if %111 {
      %c0_58 = arith.constant 0 : index
      %c0_59 = arith.constant 0 : index
      %112 = vector.load %arg14[%c0_58, %c0_59] : memref<16x32xf32, #tpu.memory_space<vmem>>, vector<16x32xf32>
      %113 = vector.shape_cast %112 : vector<16x32xf32> to vector<2x8x32xf32>
      %c0_60 = arith.constant 0 : index
      %c0_61 = arith.constant 0 : index
      %c0_62 = arith.constant 0 : index
      %114 = vector.load %arg13[%c0_60, %c0_61, %c0_62] : memref<2x8x32xf32, #tpu.memory_space<vmem>>, vector<2x8x32xf32>
      tpu.vector_store %arg13[%c0_60, %c0_61, %c0_62], %113 {strides = array<i32>} : memref<2x8x32xf32, #tpu.memory_space<vmem>>, vector<2x8x32xf32>,
    } else {
    }
    return
  }
  func.func @transform_0(%arg0: i32) -> (i32, i32, i32) {
    %c0_i32 = arith.constant 0 : i32
    %c0_i32_0 = arith.constant 0 : i32
    %c0_i32_1 = arith.constant 0 : i32
    %c0_i32_2 = arith.constant 0 : i32
    return %c0_i32, %c0_i32_0, %c0_i32_1 : i32, i32, i32
  }
  func.func @transform_1(%arg0: i32) -> (i32, i32, i32) {
    %c0_i32 = arith.constant 0 : i32
    %c0_i32_0 = arith.constant 0 : i32
    %c0_i32_1 = arith.constant 0 : i32
    return %arg0, %c0_i32, %c0_i32_0 : i32, i32, i32
  }
  func.func @transform_2(%arg0: i32) -> (i32, i32, i32) {
    %c0_i32 = arith.constant 0 : i32
    %c0_i32_0 = arith.constant 0 : i32
    %c0_i32_1 = arith.constant 0 : i32
    return %arg0, %c0_i32, %c0_i32_0 : i32, i32, i32
  }
  func.func @transform_3(%arg0: i32) -> (i32, i32, i32) {
    %c0_i32 = arith.constant 0 : i32
    %c0_i32_0 = arith.constant 0 : i32
    %c0_i32_1 = arith.constant 0 : i32
    return %arg0, %c0_i32, %c0_i32_0 : i32, i32, i32
  }
  func.func @transform_4(%arg0: i32) -> (i32, i32, i32) {
    %c0_i32 = arith.constant 0 : i32
    %c0_i32_0 = arith.constant 0 : i32
    %c0_i32_1 = arith.constant 0 : i32
    return %arg0, %c0_i32, %c0_i32_0 : i32, i32, i32
  }
  func.func @transform_5(%arg0: i32) -> (i32, i32, i32) {
    %c0_i32 = arith.constant 0 : i32
    %c0_i32_0 = arith.constant 0 : i32
    %c0_i32_1 = arith.constant 0 : i32
    return %arg0, %c0_i32, %c0_i32_0 : i32, i32, i32
  }
  func.func @transform_6(%arg0: i32) -> (i32, i32, i32) {
    %c0_i32 = arith.constant 0 : i32
    %c0_i32_0 = arith.constant 0 : i32
    %c0_i32_1 = arith.constant 0 : i32
    return %arg0, %c0_i32, %c0_i32_0 : i32, i32, i32
  }
  func.func @transform_7(%arg0: i32) -> (i32, i32, i32) {
    %c0_i32 = arith.constant 0 : i32
    %c0_i32_0 = arith.constant 0 : i32
    %c0_i32_1 = arith.constant 0 : i32
    return %arg0, %c0_i32, %c0_i32_0 : i32, i32, i32
  }
  func.func @transform_8(%arg0: i32) -> (i32, i32, i32) {
    %c0_i32 = arith.constant 0 : i32
    %c0_i32_0 = arith.constant 0 : i32
    %c0_i32_1 = arith.constant 0 : i32
    return %arg0, %c0_i32, %c0_i32_0 : i32, i32, i32
  }
  func.func @transform_9(%arg0: i32) -> (i32, i32, i32) {
    %c0_i32 = arith.constant 0 : i32
    %c0_i32_0 = arith.constant 0 : i32
    %c0_i32_1 = arith.constant 0 : i32
    return %arg0, %c0_i32, %c0_i32_0 : i32, i32, i32
  }
  func.func @transform_10(%arg0: i32) -> (i32, i32, i32) {
    %c0_i32 = arith.constant 0 : i32
    %c0_i32_0 = arith.constant 0 : i32
    %c0_i32_1 = arith.constant 0 : i32
    return %arg0, %c0_i32, %c0_i32_0 : i32, i32, i32
  }
  func.func @transform_11(%arg0: i32) -> (i32, i32, i32) {
    %c0_i32 = arith.constant 0 : i32
    %c0_i32_0 = arith.constant 0 : i32
    %c0_i32_1 = arith.constant 0 : i32
    return %arg0, %c0_i32, %c0_i32_0 : i32, i32, i32
  }
  func.func @transform_12(%arg0: i32) -> (i32, i32, i32) {
    %c0_i32 = arith.constant 0 : i32
    %c0_i32_0 = arith.constant 0 : i32
    %c0_i32_1 = arith.constant 0 : i32
    %c0_i32_2 = arith.constant 0 : i32
    return %c0_i32, %c0_i32_0, %c0_i32_1 : i32, i32, i32
  }
}

</mosaic_0001>

<llo_original>
// kernel: encoder_forward.1
$region0: #{encoder_forward.1}
  #allocation0 [shape = 'u32[]', space=smem, size = 0x4, offset = 0x4, fixed_abs, tag = 'smem constant byte address 0x4 - core index']
  #allocation1 [shape = 'u32[144,128]{1,0:T(1,128)}', space=vmem, size = 0x12000, scoped, tag = 'internal scratch']
  #allocation2 [shape = 'f32[16,32]{1,0:T(8,128)}', space=vmem, size = 0x2000, scoped, tag = 'scratch operand']
  %s0 = inlined_call_operand.vmem [shape: f32[2,8,32], index: 0, kind: input, shape index: {}]
  %s1 = inlined_call_operand.vmem [shape: bf16[2,32,32], index: 1, kind: input, shape index: {}]
  %s2 = inlined_call_operand.vmem [shape: bf16[2,32,32], index: 2, kind: input, shape index: {}]
  %s3 = inlined_call_operand.vmem [shape: bf16[2,32,32], index: 3, kind: input, shape index: {}]
  %s4 = inlined_call_operand.vmem [shape: f32[2,1,32], index: 4, kind: input, shape index: {}]
  %s5 = inlined_call_operand.vmem [shape: f32[2,1,32], index: 5, kind: input, shape index: {}]
  %s6 = inlined_call_operand.vmem [shape: bf16[2,32,128], index: 6, kind: input, shape index: {}]
  %s7 = inlined_call_operand.vmem [shape: f32[2,1,128], index: 7, kind: input, shape index: {}]
  %s8 = inlined_call_operand.vmem [shape: bf16[2,128,32], index: 8, kind: input, shape index: {}]
  %s9 = inlined_call_operand.vmem [shape: f32[2,1,32], index: 9, kind: input, shape index: {}]
  %s10 = inlined_call_operand.vmem [shape: f32[2,1,32], index: 10, kind: input, shape index: {}]
  %s11 = inlined_call_operand.vmem [shape: f32[2,1,32], index: 11, kind: input, shape index: {}]
  %s12 = inlined_call_operand.hbm [shape: f32[2,8,32], index: 12, kind: output, shape index: {}]
  %s13 = sld [smem:[#allocation0]]
  $region89: #{encoder_forward.1} parent=0
    _
  %s15 = ssub.s32 1, %s13
  %s16 = scalar_select 0, %s15, %s13
  $region1: #{encoder_forward.1} parent=0
    #allocation3 [shape = 'u8[8192]{0}', space=vmem, size = 0x2000, scoped, tag = 'output window, operand 0, single buffered']
    #allocation4 [shape = 's32[2]{0}', space=sflag, size = 0x8, scoped, tag = 'scoped memory for encoder_forward.1']
    %17 = vsyncpa [#allocation4], 0
    loop: start=0, step=1, limit=4
    $region2: #{encoder_forward.1} parent=1 // loop_pre_header
      _
    $region3: #{encoder_forward.1} parent=1 // loop_header
      %s19 = sphi 0, %s23
      %p20 = scmp.ge.s32.totalorder %s19, 4
      %s27 = sphi 0, %s27
      %s29 = sphi 0, %s27
      %s30 = sphi 0, %s29
      %s44 = sphi 0, %s30
      %s50 = sphi 0, %s52
      %s53 = sphi 0, %s50
      %s54 = sphi 0, %s53
      %s70 = sphi 0, %s54
      %s76 = sphi 0, %s78
      %s79 = sphi 0, %s76
      %s80 = sphi 0, %s79
      %s96 = sphi 0, %s80
      %s102 = sphi 0, %s104
      %s105 = sphi 0, %s102
      %s106 = sphi 0, %s105
      %s122 = sphi 0, %s106
      %s128 = sphi 0, %s130
      %s131 = sphi 0, %s128
      %s132 = sphi 0, %s131
      %s148 = sphi 0, %s132
      %s154 = sphi 0, %s156
      %s157 = sphi 0, %s154
      %s158 = sphi 0, %s157
      %s174 = sphi 0, %s158
      %s180 = sphi 0, %s182
      %s183 = sphi 0, %s180
      %s184 = sphi 0, %s183
      %s200 = sphi 0, %s184
      %s206 = sphi 0, %s208
      %s209 = sphi 0, %s206
      %s210 = sphi 0, %s209
      %s226 = sphi 0, %s210
      %s232 = sphi 0, %s234
      %s235 = sphi 0, %s232
      %s236 = sphi 0, %s235
      %s252 = sphi 0, %s236
      %s258 = sphi 0, %s260
      %s261 = sphi 0, %s258
      %s262 = sphi 0, %s261
      %s278 = sphi 0, %s262
      %s284 = sphi 0, %s286
      %s287 = sphi 0, %s284
      %s288 = sphi 0, %s287
      %s304 = sphi 0, %s288
      %s310 = sphi 0, %s312
      %s313 = sphi 0, %s310
      %s314 = sphi 0, %s313
      %s330 = sphi 0, %s314
      %s334 = sphi 0, %s334
      %s336 = sphi 0, %s334
      %s337 = sphi 0, %s336
      %s351 = sphi 0, %s337
    $region4: #{encoder_forward.1} parent=1 // loop_header_branch
      %22 = sbr.rel (%p20) target = $region8
    $region5: #{encoder_forward.1} parent=1 // loop_body
      %s24 = ssub.s32 %s19, 1
      %s25 = ssub.s32 %s19, 2
      %s26 = sadd.s32 %s19, 1
      %s28 = sadd.s32 %s27, 1
      %p31 = scmp.eq.s32.totalorder %s19, 1
      %p32 = scmp.ne.s32.totalorder %s27, %s29
      %p33 = scmp.eq.s32.totalorder %s19, 0
      %p34 = por %p32, %p33
      %p35 = scmp.ne.s32.totalorder %s27, %s29
      %p36 = scmp.eq.s32.totalorder %s24, 1
      %p37 = por %p35, %p36
      %p38 = scmp.ne.s32.totalorder %s29, %s30
      %p39 = scmp.eq.s32.totalorder %s24, 0
      %p40 = por %p38, %p39
      %p41 = scmp.ne.s32.totalorder %s29, %s30
      %p42 = scmp.eq.s32.totalorder %s25, 1
      %p43 = por %p41, %p42
      %p45 = scmp.ne.s32.totalorder %s30, %s44
      %p46 = scmp.eq.s32.totalorder %s25, 0
      %p47 = por %p45, %p46
      %s48 = ssub.s32 %s19, %s26
      %p49 = scmp.eq.s32.totalorder %s48, 0
      %s51 = sadd.s32 %s50, 1
      %s52 = scalar_select %p49, %s50, %s51
      %p55 = pneg %p49
      %p56 = scmp.eq.s32.totalorder %s19, 1
      %p57 = por %p55, %p56
      %p58 = scmp.ne.s32.totalorder %s50, %s53
      %p59 = scmp.eq.s32.totalorder %s19, 0
      %p60 = por %p58, %p59
      %p61 = scmp.ne.s32.totalorder %s50, %s53
      %p62 = scmp.eq.s32.totalorder %s24, 1
      %p63 = por %p61, %p62
      %p64 = scmp.ne.s32.totalorder %s53, %s54
      %p65 = scmp.eq.s32.totalorder %s24, 0
      %p66 = por %p64, %p65
      %p67 = scmp.ne.s32.totalorder %s53, %s54
      %p68 = scmp.eq.s32.totalorder %s25, 1
      %p69 = por %p67, %p68
      %p71 = scmp.ne.s32.totalorder %s54, %s70
      %p72 = scmp.eq.s32.totalorder %s25, 0
      %p73 = por %p71, %p72
      %s74 = ssub.s32 %s19, %s26
      %p75 = scmp.eq.s32.totalorder %s74, 0
      %s77 = sadd.s32 %s76, 1
      %s78 = scalar_select %p75, %s76, %s77
      %p81 = pneg %p75
      %p82 = scmp.eq.s32.totalorder %s19, 1
      %p83 = por %p81, %p82
      %p84 = scmp.ne.s32.totalorder %s76, %s79
      %p85 = scmp.eq.s32.totalorder %s19, 0
      %p86 = por %p84, %p85
      %p87 = scmp.ne.s32.totalorder %s76, %s79
      %p88 = scmp.eq.s32.totalorder %s24, 1
      %p89 = por %p87, %p88
      %p90 = scmp.ne.s32.totalorder %s79, %s80
      %p91 = scmp.eq.s32.totalorder %s24, 0
      %p92 = por %p90, %p91
      %p93 = scmp.ne.s32.totalorder %s79, %s80
      %p94 = scmp.eq.s32.totalorder %s25, 1
      %p95 = por %p93, %p94
      %p97 = scmp.ne.s32.totalorder %s80, %s96
      %p98 = scmp.eq.s32.totalorder %s25, 0
      %p99 = por %p97, %p98
      %s100 = ssub.s32 %s19, %s26
      %p101 = scmp.eq.s32.totalorder %s100, 0
      %s103 = sadd.s32 %s102, 1
      %s104 = scalar_select %p101, %s102, %s103
      %p107 = pneg %p101
      %p108 = scmp.eq.s32.totalorder %s19, 1
      %p109 = por %p107, %p108
      %p110 = scmp.ne.s32.totalorder %s102, %s105
      %p111 = scmp.eq.s32.totalorder %s19, 0
      %p112 = por %p110, %p111
      %p113 = scmp.ne.s32.totalorder %s102, %s105
      %p114 = scmp.eq.s32.totalorder %s24, 1
      %p115 = por %p113, %p114
      %p116 = scmp.ne.s32.totalorder %s105, %s106
      %p117 = scmp.eq.s32.totalorder %s24, 0
      %p118 = por %p116, %p117
      %p119 = scmp.ne.s32.totalorder %s105, %s106
      %p120 = scmp.eq.s32.totalorder %s25, 1
      %p121 = por %p119, %p120
      %p123 = scmp.ne.s32.totalorder %s106, %s122
      %p124 = scmp.eq.s32.totalorder %s25, 0
      %p125 = por %p123, %p124
      %s126 = ssub.s32 %s19, %s26
      %p127 = scmp.eq.s32.totalorder %s126, 0
      %s129 = sadd.s32 %s128, 1
      %s130 = scalar_select %p127, %s128, %s129
      %p133 = pneg %p127
      %p134 = scmp.eq.s32.totalorder %s19, 1
      %p135 = por %p133, %p134
      %p136 = scmp.ne.s32.totalorder %s128, %s131
      %p137 = scmp.eq.s32.totalorder %s19, 0
      %p138 = por %p136, %p137
      %p139 = scmp.ne.s32.totalorder %s128, %s131
      %p140 = scmp.eq.s32.totalorder %s24, 1
      %p141 = por %p139, %p140
      %p142 = scmp.ne.s32.totalorder %s131, %s132
      %p143 = scmp.eq.s32.totalorder %s24, 0
      %p144 = por %p142, %p143
      %p145 = scmp.ne.s32.totalorder %s131, %s132
      %p146 = scmp.eq.s32.totalorder %s25, 1
      %p147 = por %p145, %p146
      %p149 = scmp.ne.s32.totalorder %s132, %s148
      %p150 = scmp.eq.s32.totalorder %s25, 0
      %p151 = por %p149, %p150
      %s152 = ssub.s32 %s19, %s26
      %p153 = scmp.eq.s32.totalorder %s152, 0
      %s155 = sadd.s32 %s154, 1
      %s156 = scalar_select %p153, %s154, %s155
      %p159 = pneg %p153
      %p160 = scmp.eq.s32.totalorder %s19, 1
      %p161 = por %p159, %p160
      %p162 = scmp.ne.s32.totalorder %s154, %s157
      %p163 = scmp.eq.s32.totalorder %s19, 0
      %p164 = por %p162, %p163
      %p165 = scmp.ne.s32.totalorder %s154, %s157
      %p166 = scmp.eq.s32.totalorder %s24, 1
      %p167 = por %p165, %p166
      %p168 = scmp.ne.s32.totalorder %s157, %s158
      %p169 = scmp.eq.s32.totalorder %s24, 0
      %p170 = por %p168, %p169
      %p171 = scmp.ne.s32.totalorder %s157, %s158
      %p172 = scmp.eq.s32.totalorder %s25, 1
      %p173 = por %p171, %p172
      %p175 = scmp.ne.s32.totalorder %s158, %s174
      %p176 = scmp.eq.s32.totalorder %s25, 0
      %p177 = por %p175, %p176
      %s178 = ssub.s32 %s19, %s26
      %p179 = scmp.eq.s32.totalorder %s178, 0
      %s181 = sadd.s32 %s180, 1
      %s182 = scalar_select %p179, %s180, %s181
      %p185 = pneg %p179
      %p186 = scmp.eq.s32.totalorder %s19, 1
      %p187 = por %p185, %p186
      %p188 = scmp.ne.s32.totalorder %s180, %s183
      %p189 = scmp.eq.s32.totalorder %s19, 0
      %p190 = por %p188, %p189
      %p191 = scmp.ne.s32.totalorder %s180, %s183
      %p192 = scmp.eq.s32.totalorder %s24, 1
      %p193 = por %p191, %p192
      %p194 = scmp.ne.s32.totalorder %s183, %s184
      %p195 = scmp.eq.s32.totalorder %s24, 0
      %p196 = por %p194, %p195
      %p197 = scmp.ne.s32.totalorder %s183, %s184
      %p198 = scmp.eq.s32.totalorder %s25, 1
      %p199 = por %p197, %p198
      %p201 = scmp.ne.s32.totalorder %s184, %s200
      %p202 = scmp.eq.s32.totalorder %s25, 0
      %p203 = por %p201, %p202
      %s204 = ssub.s32 %s19, %s26
      %p205 = scmp.eq.s32.totalorder %s204, 0
      %s207 = sadd.s32 %s206, 1
      %s208 = scalar_select %p205, %s206, %s207
      %p211 = pneg %p205
      %p212 = scmp.eq.s32.totalorder %s19, 1
      %p213 = por %p211, %p212
      %p214 = scmp.ne.s32.totalorder %s206, %s209
      %p215 = scmp.eq.s32.totalorder %s19, 0
      %p216 = por %p214, %p215
      %p217 = scmp.ne.s32.totalorder %s206, %s209
      %p218 = scmp.eq.s32.totalorder %s24, 1
      %p219 = por %p217, %p218
      %p220 = scmp.ne.s32.totalorder %s209, %s210
      %p221 = scmp.eq.s32.totalorder %s24, 0
      %p222 = por %p220, %p221
      %p223 = scmp.ne.s32.totalorder %s209, %s210
      %p224 = scmp.eq.s32.totalorder %s25, 1
      %p225 = por %p223, %p224
      %p227 = scmp.ne.s32.totalorder %s210, %s226
      %p228 = scmp.eq.s32.totalorder %s25, 0
      %p229 = por %p227, %p228
      %s230 = ssub.s32 %s19, %s26
      %p231 = scmp.eq.s32.totalorder %s230, 0
      %s233 = sadd.s32 %s232, 1
      %s234 = scalar_select %p231, %s232, %s233
      %p237 = pneg %p231
      %p238 = scmp.eq.s32.totalorder %s19, 1
      %p239 = por %p237, %p238
      %p240 = scmp.ne.s32.totalorder %s232, %s235
      %p241 = scmp.eq.s32.totalorder %s19, 0
      %p242 = por %p240, %p241
      %p243 = scmp.ne.s32.totalorder %s232, %s235
      %p244 = scmp.eq.s32.totalorder %s24, 1
      %p245 = por %p243, %p244
      %p246 = scmp.ne.s32.totalorder %s235, %s236
      %p247 = scmp.eq.s32.totalorder %s24, 0
      %p248 = por %p246, %p247
      %p249 = scmp.ne.s32.totalorder %s235, %s236
      %p250 = scmp.eq.s32.totalorder %s25, 1
      %p251 = por %p249, %p250
      %p253 = scmp.ne.s32.totalorder %s236, %s252
      %p254 = scmp.eq.s32.totalorder %s25, 0
      %p255 = por %p253, %p254
      %s256 = ssub.s32 %s19, %s26
      %p257 = scmp.eq.s32.totalorder %s256, 0
      %s259 = sadd.s32 %s258, 1
      %s260 = scalar_select %p257, %s258, %s259
      %p263 = pneg %p257
      %p264 = scmp.eq.s32.totalorder %s19, 1
      %p265 = por %p263, %p264
      %p266 = scmp.ne.s32.totalorder %s258, %s261
      %p267 = scmp.eq.s32.totalorder %s19, 0
      %p268 = por %p266, %p267
      %p269 = scmp.ne.s32.totalorder %s258, %s261
      %p270 = scmp.eq.s32.totalorder %s24, 1
      %p271 = por %p269, %p270
      %p272 = scmp.ne.s32.totalorder %s261, %s262
      %p273 = scmp.eq.s32.totalorder %s24, 0
      %p274 = por %p272, %p273
      %p275 = scmp.ne.s32.totalorder %s261, %s262
      %p276 = scmp.eq.s32.totalorder %s25, 1
      %p277 = por %p275, %p276
      %p279 = scmp.ne.s32.totalorder %s262, %s278
      %p280 = scmp.eq.s32.totalorder %s25, 0
      %p281 = por %p279, %p280
      %s282 = ssub.s32 %s19, %s26
      %p283 = scmp.eq.s32.totalorder %s282, 0
      %s285 = sadd.s32 %s284, 1
      %s286 = scalar_select %p283, %s284, %s285
      %p289 = pneg %p283
      %p290 = scmp.eq.s32.totalorder %s19, 1
      %p291 = por %p289, %p290
      %p292 = scmp.ne.s32.totalorder %s284, %s287
      %p293 = scmp.eq.s32.totalorder %s19, 0
      %p294 = por %p292, %p293
      %p295 = scmp.ne.s32.totalorder %s284, %s287
      %p296 = scmp.eq.s32.totalorder %s24, 1
      %p297 = por %p295, %p296
      %p298 = scmp.ne.s32.totalorder %s287, %s288
      %p299 = scmp.eq.s32.totalorder %s24, 0
      %p300 = por %p298, %p299
      %p301 = scmp.ne.s32.totalorder %s287, %s288
      %p302 = scmp.eq.s32.totalorder %s25, 1
      %p303 = por %p301, %p302
      %p305 = scmp.ne.s32.totalorder %s288, %s304
      %p306 = scmp.eq.s32.totalorder %s25, 0
      %p307 = por %p305, %p306
      %s308 = ssub.s32 %s19, %s26
      %p309 = scmp.eq.s32.totalorder %s308, 0
      %s311 = sadd.s32 %s310, 1
      %s312 = scalar_select %p309, %s310, %s311
      %p315 = pneg %p309
      %p316 = scmp.eq.s32.totalorder %s19, 1
      %p317 = por %p315, %p316
      %p318 = scmp.ne.s32.totalorder %s310, %s313
      %p319 = scmp.eq.s32.totalorder %s19, 0
      %p320 = por %p318, %p319
      %p321 = scmp.ne.s32.totalorder %s310, %s313
      %p322 = scmp.eq.s32.totalorder %s24, 1
      %p323 = por %p321, %p322
      %p324 = scmp.ne.s32.totalorder %s313, %s314
      %p325 = scmp.eq.s32.totalorder %s24, 0
      %p326 = por %p324, %p325
      %p327 = scmp.ne.s32.totalorder %s313, %s314
      %p328 = scmp.eq.s32.totalorder %s25, 1
      %p329 = por %p327, %p328
      %p331 = scmp.ne.s32.totalorder %s314, %s330
      %p332 = scmp.eq.s32.totalorder %s25, 0
      %p333 = por %p331, %p332
      %s335 = sadd.s32 %s334, 1
      %p338 = scmp.eq.s32.totalorder %s19, 1
      %p339 = scmp.ne.s32.totalorder %s334, %s336
      %p340 = scmp.eq.s32.totalorder %s19, 0
      %p341 = por %p339, %p340
      %p342 = scmp.ne.s32.totalorder %s334, %s336
      %p343 = scmp.eq.s32.totalorder %s24, 1
      %p344 = por %p342, %p343
      %p345 = scmp.ne.s32.totalorder %s336, %s337
      %p346 = scmp.eq.s32.totalorder %s24, 0
      %p347 = por %p345, %p346
      %p348 = scmp.ne.s32.totalorder %s336, %s337
      %p349 = scmp.eq.s32.totalorder %s25, 1
      %p350 = por %p348, %p349
      %p352 = scmp.ne.s32.totalorder %s337, %s351
      %p353 = scmp.eq.s32.totalorder %s25, 0
      %p354 = por %p352, %p353
      %p355 = scmp.le.s32.totalorder 1, %s19
      %p356 = scmp.lt.s32.totalorder %s19, 3
      %p357 = pnand %p355, %p356
      %p358 = pneg %p357
      // Predicated region
      $region9: #{encoder_forward.1} parent=5 // pred_check
        _
      $region10: #{encoder_forward.1} parent=5 // pred_check_branch
        %360 = sbr.rel (%p357) target = $region12
      $region11: #{encoder_forward.1} parent=5 // pred_region
        %s361 = ssub.s32 %s19, 1
        // Predicated region
        $region13: #{encoder_forward.1} parent=11 // pred_check
          %p362 = pneg %p40
        $region14: #{encoder_forward.1} parent=11 // pred_check_branch
          %364 = sbr.rel (%p362) target = $region16
        $region15: #{encoder_forward.1} parent=11 // pred_region
          _
        $region16: #{encoder_forward.1} parent=11 // pred_fallthru
          _
      $region12: #{encoder_forward.1} parent=5 // pred_fallthru
        _
      %p365 = scmp.lt.s32.totalorder %s19, 2
      // Predicated region
      $region17: #{encoder_forward.1} parent=5 // pred_check
        %p366 = pneg %p365
      $region18: #{encoder_forward.1} parent=5 // pred_check_branch
        %368 = sbr.rel (%p366) target = $region20
      $region19: #{encoder_forward.1} parent=5 // pred_region
        // Predicated region
        $region21: #{encoder_forward.1} parent=19 // pred_check
          %p369 = pneg %p60
        $region22: #{encoder_forward.1} parent=19 // pred_check_branch
          %371 = sbr.rel (%p369) target = $region24
        $region23: #{encoder_forward.1} parent=19 // pred_region
          %p372 = scmp.lt.s32.totalorder %s19, 1
          %s373 = scalar_select %p372, %s19, 1
          %s374 = smul.addr %s373, 4
          %s375 = smul.addr %s374, 4
          %s376 = scalar_lea.vmem %s1, %s375
        $region24: #{encoder_forward.1} parent=19 // pred_fallthru
          _
        // Predicated region
        $region25: #{encoder_forward.1} parent=19 // pred_check
          %p377 = pneg %p86
        $region26: #{encoder_forward.1} parent=19 // pred_check_branch
          %379 = sbr.rel (%p377) target = $region28
        $region27: #{encoder_forward.1} parent=19 // pred_region
          %p380 = scmp.lt.s32.totalorder %s19, 1
          %s381 = scalar_select %p380, %s19, 1
          %s382 = smul.addr %s381, 4
          %s383 = smul.addr %s382, 4
          %s384 = scalar_lea.vmem %s2, %s383
        $region28: #{encoder_forward.1} parent=19 // pred_fallthru
          _
        // Predicated region
        $region29: #{encoder_forward.1} parent=19 // pred_check
          %p385 = pneg %p112
        $region30: #{encoder_forward.1} parent=19 // pred_check_branch
          %387 = sbr.rel (%p385) target = $region32
        $region31: #{encoder_forward.1} parent=19 // pred_region
          %p388 = scmp.lt.s32.totalorder %s19, 1
          %s389 = scalar_select %p388, %s19, 1
          %s390 = smul.addr %s389, 4
          %s391 = smul.addr %s390, 4
          %s392 = scalar_lea.vmem %s3, %s391
        $region32: #{encoder_forward.1} parent=19 // pred_fallthru
          _
        // Predicated region
        $region33: #{encoder_forward.1} parent=19 // pred_check
          %p393 = pneg %p138
        $region34: #{encoder_forward.1} parent=19 // pred_check_branch
          %395 = sbr.rel (%p393) target = $region36
        $region35: #{encoder_forward.1} parent=19 // pred_region
          %p396 = scmp.lt.s32.totalorder %s19, 1
          %s397 = scalar_select %p396, %s19, 1
          %s398 = scalar_lea.vmem %s4, %s397
        $region36: #{encoder_forward.1} parent=19 // pred_fallthru
          _
        // Predicated region
        $region37: #{encoder_forward.1} parent=19 // pred_check
          %p399 = pneg %p164
        $region38: #{encoder_forward.1} parent=19 // pred_check_branch
          %401 = sbr.rel (%p399) target = $region40
        $region39: #{encoder_forward.1} parent=19 // pred_region
          %p402 = scmp.lt.s32.totalorder %s19, 1
          %s403 = scalar_select %p402, %s19, 1
          %s404 = scalar_lea.vmem %s5, %s403
        $region40: #{encoder_forward.1} parent=19 // pred_fallthru
          _
        // Predicated region
        $region41: #{encoder_forward.1} parent=19 // pred_check
          %p405 = pneg %p190
        $region42: #{encoder_forward.1} parent=19 // pred_check_branch
          %407 = sbr.rel (%p405) target = $region44
        $region43: #{encoder_forward.1} parent=19 // pred_region
          %p408 = scmp.lt.s32.totalorder %s19, 1
          %s409 = scalar_select %p408, %s19, 1
          %s410 = smul.addr %s409, 4
          %s411 = smul.addr %s410, 4
          %s412 = scalar_lea.vmem %s6, %s411
        $region44: #{encoder_forward.1} parent=19 // pred_fallthru
          _
        // Predicated region
        $region45: #{encoder_forward.1} parent=19 // pred_check
          %p413 = pneg %p216
        $region46: #{encoder_forward.1} parent=19 // pred_check_branch
          %415 = sbr.rel (%p413) target = $region48
        $region47: #{encoder_forward.1} parent=19 // pred_region
          %p416 = scmp.lt.s32.totalorder %s19, 1
          %s417 = scalar_select %p416, %s19, 1
          %s418 = scalar_lea.vmem %s7, %s417
        $region48: #{encoder_forward.1} parent=19 // pred_fallthru
          _
        // Predicated region
        $region49: #{encoder_forward.1} parent=19 // pred_check
          %p419 = pneg %p242
        $region50: #{encoder_forward.1} parent=19 // pred_check_branch
          %421 = sbr.rel (%p419) target = $region52
        $region51: #{encoder_forward.1} parent=19 // pred_region
          %p422 = scmp.lt.s32.totalorder %s19, 1
          %s423 = scalar_select %p422, %s19, 1
          %s424 = smul.addr %s423, 16
          %s425 = smul.addr %s424, 4
          %s426 = scalar_lea.vmem %s8, %s425
        $region52: #{encoder_forward.1} parent=19 // pred_fallthru
          _
        // Predicated region
        $region53: #{encoder_forward.1} parent=19 // pred_check
          %p427 = pneg %p268
        $region54: #{encoder_forward.1} parent=19 // pred_check_branch
          %429 = sbr.rel (%p427) target = $region56
        $region55: #{encoder_forward.1} parent=19 // pred_region
          %p430 = scmp.lt.s32.totalorder %s19, 1
          %s431 = scalar_select %p430, %s19, 1
          %s432 = scalar_lea.vmem %s9, %s431
        $region56: #{encoder_forward.1} parent=19 // pred_fallthru
          _
        // Predicated region
        $region57: #{encoder_forward.1} parent=19 // pred_check
          %p433 = pneg %p294
        $region58: #{encoder_forward.1} parent=19 // pred_check_branch
          %435 = sbr.rel (%p433) target = $region60
        $region59: #{encoder_forward.1} parent=19 // pred_region
          %p436 = scmp.lt.s32.totalorder %s19, 1
          %s437 = scalar_select %p436, %s19, 1
          %s438 = scalar_lea.vmem %s10, %s437
        $region60: #{encoder_forward.1} parent=19 // pred_fallthru
          _
        // Predicated region
        $region61: #{encoder_forward.1} parent=19 // pred_check
          %p439 = pneg %p320
        $region62: #{encoder_forward.1} parent=19 // pred_check_branch
          %441 = sbr.rel (%p439) target = $region64
        $region63: #{encoder_forward.1} parent=19 // pred_region
          %p442 = scmp.lt.s32.totalorder %s19, 1
          %s443 = scalar_select %p442, %s19, 1
          %s444 = scalar_lea.vmem %s11, %s443
        $region64: #{encoder_forward.1} parent=19 // pred_fallthru
          _
      $region20: #{encoder_forward.1} parent=5 // pred_fallthru
        _
      %p445 = scmp.le.s32.totalorder 1, %s19
      %p446 = scmp.lt.s32.totalorder %s19, 3
      %p447 = pnand %p445, %p446
      %p448 = pneg %p447
      // Predicated region
      $region65: #{encoder_forward.1} parent=5 // pred_check
        _
      $region66: #{encoder_forward.1} parent=5 // pred_check_branch
        %450 = sbr.rel (%p447) target = $region68
      $region67: #{encoder_forward.1} parent=5 // pred_region
        %s451 = ssub.s32 %s19, 1
        %p452 = pneg %p40
        %p453 = pneg %p37
        %p454 = scmp.lt.s32.totalorder %s24, 1
        %s455 = scalar_select %p454, %s24, 1
        %s456 = smul.addr %s455, 4
        %s457 = smul.addr %s456, 4
        %s458 = scalar_lea.vmem %s1, %s457
        %p459 = pneg %p66
        %p460 = pneg %p63
        %p461 = scmp.lt.s32.totalorder %s24, 1
        %s462 = scalar_select %p461, %s24, 1
        %s463 = smul.addr %s462, 4
        %s464 = smul.addr %s463, 4
        %s465 = scalar_lea.vmem %s2, %s464
        %p466 = pneg %p92
        %p467 = pneg %p89
        %p468 = scmp.lt.s32.totalorder %s24, 1
        %s469 = scalar_select %p468, %s24, 1
        %s470 = smul.addr %s469, 4
        %s471 = smul.addr %s470, 4
        %s472 = scalar_lea.vmem %s3, %s471
        %p473 = pneg %p118
        %p474 = pneg %p115
        %p475 = scmp.lt.s32.totalorder %s24, 1
        %s476 = scalar_select %p475, %s24, 1
        %s477 = scalar_lea.vmem %s4, %s476
        %p478 = pneg %p144
        %p479 = pneg %p141
        %p480 = scmp.lt.s32.totalorder %s24, 1
        %s481 = scalar_select %p480, %s24, 1
        %s482 = scalar_lea.vmem %s5, %s481
        %p483 = pneg %p170
        %p484 = pneg %p167
        %p485 = scmp.lt.s32.totalorder %s24, 1
        %s486 = scalar_select %p485, %s24, 1
        %s487 = smul.addr %s486, 4
        %s488 = smul.addr %s487, 4
        %s489 = scalar_lea.vmem %s6, %s488
        %p490 = pneg %p196
        %p491 = pneg %p193
        %p492 = scmp.lt.s32.totalorder %s24, 1
        %s493 = scalar_select %p492, %s24, 1
        %s494 = scalar_lea.vmem %s7, %s493
        %p495 = pneg %p222
        %p496 = pneg %p219
        %p497 = scmp.lt.s32.totalorder %s24, 1
        %s498 = scalar_select %p497, %s24, 1
        %s499 = smul.addr %s498, 16
        %s500 = smul.addr %s499, 4
        %s501 = scalar_lea.vmem %s8, %s500
        %p502 = pneg %p248
        %p503 = pneg %p245
        %p504 = scmp.lt.s32.totalorder %s24, 1
        %s505 = scalar_select %p504, %s24, 1
        %s506 = scalar_lea.vmem %s9, %s505
        %p507 = pneg %p274
        %p508 = pneg %p271
        %p509 = scmp.lt.s32.totalorder %s24, 1
        %s510 = scalar_select %p509, %s24, 1
        %s511 = scalar_lea.vmem %s10, %s510
        %p512 = pneg %p300
        %p513 = pneg %p297
        %p514 = scmp.lt.s32.totalorder %s24, 1
        %s515 = scalar_select %p514, %s24, 1
        %s516 = scalar_lea.vmem %s11, %s515
        %p517 = pneg %p326
        %p518 = pneg %p323
        %p519 = pneg %p347
        %p520 = pneg %p344
        %p521 = scmp.lt.s32.totalorder %s24, 1
        %s522 = scalar_select %p521, %s24, 1
        %s523 = smul.addr %s522, 4
        %s524 = smul.addr %s523, 4
        %s525 = scalar_lea.vmem %s1, %s524
        %p526 = scmp.lt.s32.totalorder %s24, 1
        %s527 = scalar_select %p526, %s24, 1
        %s528 = smul.addr %s527, 4
        %s529 = smul.addr %s528, 4
        %s530 = scalar_lea.vmem %s2, %s529
        %p531 = scmp.lt.s32.totalorder %s24, 1
        %s532 = scalar_select %p531, %s24, 1
        %s533 = smul.addr %s532, 4
        %s534 = smul.addr %s533, 4
        %s535 = scalar_lea.vmem %s3, %s534
        %p536 = scmp.lt.s32.totalorder %s24, 1
        %s537 = scalar_select %p536, %s24, 1
        %s538 = scalar_lea.vmem %s4, %s537
        %p539 = scmp.lt.s32.totalorder %s24, 1
        %s540 = scalar_select %p539, %s24, 1
        %s541 = scalar_lea.vmem %s5, %s540
        %p542 = scmp.lt.s32.totalorder %s24, 1
        %s543 = scalar_select %p542, %s24, 1
        %s544 = smul.addr %s543, 4
        %s545 = smul.addr %s544, 4
        %s546 = scalar_lea.vmem %s6, %s545
        %p547 = scmp.lt.s32.totalorder %s24, 1
        %s548 = scalar_select %p547, %s24, 1
        %s549 = scalar_lea.vmem %s7, %s548
        %p550 = scmp.lt.s32.totalorder %s24, 1
        %s551 = scalar_select %p550, %s24, 1
        %s552 = smul.addr %s551, 16
        %s553 = smul.addr %s552, 4
        %s554 = scalar_lea.vmem %s8, %s553
        %p555 = scmp.lt.s32.totalorder %s24, 1
        %s556 = scalar_select %p555, %s24, 1
        %s557 = scalar_lea.vmem %s9, %s556
        %p558 = scmp.lt.s32.totalorder %s24, 1
        %s559 = scalar_select %p558, %s24, 1
        %s560 = scalar_lea.vmem %s10, %s559
        %p561 = scmp.lt.s32.totalorder %s24, 1
        %s562 = scalar_select %p561, %s24, 1
        %s563 = scalar_lea.vmem %s11, %s562
        %p565 = scmp.eq.s32.totalorder %s24, 0
        // Predicated region
        $region69: #{encoder_forward.1} parent=67 // pred_check
          %p566 = pneg %p565
        $region70: #{encoder_forward.1} parent=67 // pred_check_branch
          %568 = sbr.rel (%p566) target = $region72
        $region71: #{encoder_forward.1} parent=67 // pred_region
          %v569 = vld [vmem:[%s0] sm:$0xff]
          %v570 = vld [vmem:[%s0 + $0x8] sm:$0xff]
          %vm571 = vcmask 261120
          %572 = vst.msk [vmem:[#allocation2] sm:$0xff] %vm571, %v569
          %573 = vst.msk [vmem:[#allocation2 + $0x8] sm:$0xff] %vm571, %v570
        $region72: #{encoder_forward.1} parent=67 // pred_fallthru
          _
        %v574 = vld [vmem:[#allocation2] sm:$0xff]
        %v575 = vld [vmem:[#allocation2 + $0x8] sm:$0xff]
        %v576 = vpack.c.bf16 %v575, %v574
        %v577 = vld [vmem:[%s525] sm:$0xf]
        %v578 = vld [vmem:[%s525 + $0x4] sm:$0xf]
        %v579 = vld [vmem:[%s525 + $0x8] sm:$0xf]
        %v580 = vld [vmem:[%s525 + $0xc] sm:$0xf]
        %v585 = vunpack.c.l.b16 %v577
        %v586 = vunpack.c.l.b16 %v578
        %v587 = vunpack.c.l.b16 %v579
        %v588 = vunpack.c.l.b16 %v580
        %v589 = vpack.c.b16 %v586, %v585
        %v590 = vpack.c.b16 %v588, %v587
        %vm593 = vcmask 261120
        %v595 = vsel %vm593, %v576, 0
        %597 = vmatprep.subr.bf16.mxu0 0
        %598 = vmatpush1.bf16.msra.mxu0 %v589
        %599 = vmatprep.subr.bf16.mxu0 0
        %600 = vmatpush1.bf16.msra.mxu0 %v590
        %601 = vmatprep.subr.bf16.mxu0 0
        %602 = vmatpush1.bf16.msra.mxu0 0
        %603 = vmatprep.subr.bf16.mxu0 0
        %604 = vmatpush1.bf16.msra.mxu0 0
        %605 = vmatprep.subr.bf16.mxu0 0
        %606 = vmatpush1.bf16.msra.mxu0 0
        %607 = vmatprep.subr.bf16.mxu0 0
        %608 = vmatpush1.bf16.msra.mxu0 0
        %609 = vmatprep.subr.bf16.mxu0 0
        %610 = vmatpush1.bf16.msra.mxu0 0
        %611 = vmatprep.subr.bf16.mxu0 0
        %612 = vmatpush1.bf16.msra.mxu0 0
        %613 = vmatprep.subr.bf16.mxu0 0
        %614 = vmatpush1.bf16.msra.mxu0 0
        %615 = vmatprep.subr.bf16.mxu0 0
        %616 = vmatpush1.bf16.msra.mxu0 0
        %617 = vmatprep.subr.bf16.mxu0 0
        %618 = vmatpush1.bf16.msra.mxu0 0
        %619 = vmatprep.subr.bf16.mxu0 0
        %620 = vmatpush1.bf16.msra.mxu0 0
        %621 = vmatprep.subr.bf16.mxu0 0
        %622 = vmatpush1.bf16.msra.mxu0 0
        %623 = vmatprep.subr.bf16.mxu0 0
        %624 = vmatpush1.bf16.msra.mxu0 0
        %625 = vmatprep.subr.bf16.mxu0 0
        %626 = vmatpush1.bf16.msra.mxu0 0
        %627 = vmatprep.subr.bf16.mxu0 0
        %628 = vmatpush1.bf16.msra.mxu0 0
        %629 = vmatprep.mubr.bf16.mxu0 0
        %630 = vmatmul.mubr.bf16.gmra.mrb[0].mxu0 %v595
        %v631 = vpop.f32.mrb[0].mxu0
        %v632 = vadd.f32 0.0, %v631
        %v633 = vpop.f32.mrb[0].mxu0
        %v634 = vpop.f32.mrb[0].mxu0
        %v635 = vadd.f32 0.0, %v634
        %v636 = vpop.f32.mrb[0].mxu0
        %637 = vdwg.mxu0
        %v638 = vmul.f32 %v632, 0.17677669
        %v639 = vmul.f32 %v635, 0.17677669
        %v640 = vld [vmem:[%s530] sm:$0xf]
        %v641 = vld [vmem:[%s530 + $0x4] sm:$0xf]
        %v642 = vld [vmem:[%s530 + $0x8] sm:$0xf]
        %v643 = vld [vmem:[%s530 + $0xc] sm:$0xf]
        %v648 = vunpack.c.l.b16 %v640
        %v649 = vunpack.c.l.b16 %v641
        %v650 = vunpack.c.l.b16 %v642
        %v651 = vunpack.c.l.b16 %v643
        %v652 = vpack.c.b16 %v649, %v648
        %v653 = vpack.c.b16 %v651, %v650
        %656 = vmatprep.subr.bf16.mxu0 0
        %657 = vmatpush1.bf16.msra.mxu0 %v652
        %658 = vmatprep.subr.bf16.mxu0 0
        %659 = vmatpush1.bf16.msra.mxu0 %v653
        %660 = vmatprep.subr.bf16.mxu0 0
        %661 = vmatpush1.bf16.msra.mxu0 0
        %662 = vmatprep.subr.bf16.mxu0 0
        %663 = vmatpush1.bf16.msra.mxu0 0
        %664 = vmatprep.subr.bf16.mxu0 0
        %665 = vmatpush1.bf16.msra.mxu0 0
        %666 = vmatprep.subr.bf16.mxu0 0
        %667 = vmatpush1.bf16.msra.mxu0 0
        %668 = vmatprep.subr.bf16.mxu0 0
        %669 = vmatpush1.bf16.msra.mxu0 0
        %670 = vmatprep.subr.bf16.mxu0 0
        %671 = vmatpush1.bf16.msra.mxu0 0
        %672 = vmatprep.subr.bf16.mxu0 0
        %673 = vmatpush1.bf16.msra.mxu0 0
        %674 = vmatprep.subr.bf16.mxu0 0
        %675 = vmatpush1.bf16.msra.mxu0 0
        %676 = vmatprep.subr.bf16.mxu0 0
        %677 = vmatpush1.bf16.msra.mxu0 0
        %678 = vmatprep.subr.bf16.mxu0 0
        %679 = vmatpush1.bf16.msra.mxu0 0
        %680 = vmatprep.subr.bf16.mxu0 0
        %681 = vmatpush1.bf16.msra.mxu0 0
        %682 = vmatprep.subr.bf16.mxu0 0
        %683 = vmatpush1.bf16.msra.mxu0 0
        %684 = vmatprep.subr.bf16.mxu0 0
        %685 = vmatpush1.bf16.msra.mxu0 0
        %686 = vmatprep.subr.bf16.mxu0 0
        %687 = vmatpush1.bf16.msra.mxu0 0
        %688 = vmatprep.mubr.bf16.mxu0 0
        %689 = vmatmul.mubr.bf16.gmra.mrb[0].mxu0 %v595
        %v690 = vpop.f32.mrb[0].mxu0
        %v691 = vadd.f32 0.0, %v690
        %v692 = vpop.f32.mrb[0].mxu0
        %v693 = vpop.f32.mrb[0].mxu0
        %v694 = vadd.f32 0.0, %v693
        %v695 = vpop.f32.mrb[0].mxu0
        %696 = vdwg.mxu0
        %v697 = vld [vmem:[%s535] sm:$0xf]
        %v698 = vld [vmem:[%s535 + $0x4] sm:$0xf]
        %v699 = vld [vmem:[%s535 + $0x8] sm:$0xf]
        %v700 = vld [vmem:[%s535 + $0xc] sm:$0xf]
        %v705 = vunpack.c.l.b16 %v697
        %v706 = vunpack.c.l.b16 %v698
        %v707 = vunpack.c.l.b16 %v699
        %v708 = vunpack.c.l.b16 %v700
        %v709 = vpack.c.b16 %v706, %v705
        %v710 = vpack.c.b16 %v708, %v707
        %713 = vmatprep.subr.bf16.mxu0 0
        %714 = vmatpush1.bf16.msra.mxu0 %v709
        %715 = vmatprep.subr.bf16.mxu0 0
        %716 = vmatpush1.bf16.msra.mxu0 %v710
        %717 = vmatprep.subr.bf16.mxu0 0
        %718 = vmatpush1.bf16.msra.mxu0 0
        %719 = vmatprep.subr.bf16.mxu0 0
        %720 = vmatpush1.bf16.msra.mxu0 0
        %721 = vmatprep.subr.bf16.mxu0 0
        %722 = vmatpush1.bf16.msra.mxu0 0
        %723 = vmatprep.subr.bf16.mxu0 0
        %724 = vmatpush1.bf16.msra.mxu0 0
        %725 = vmatprep.subr.bf16.mxu0 0
        %726 = vmatpush1.bf16.msra.mxu0 0
        %727 = vmatprep.subr.bf16.mxu0 0
        %728 = vmatpush1.bf16.msra.mxu0 0
        %729 = vmatprep.subr.bf16.mxu0 0
        %730 = vmatpush1.bf16.msra.mxu0 0
        %731 = vmatprep.subr.bf16.mxu0 0
        %732 = vmatpush1.bf16.msra.mxu0 0
        %733 = vmatprep.subr.bf16.mxu0 0
        %734 = vmatpush1.bf16.msra.mxu0 0
        %735 = vmatprep.subr.bf16.mxu0 0
        %736 = vmatpush1.bf16.msra.mxu0 0
        %737 = vmatprep.subr.bf16.mxu0 0
        %738 = vmatpush1.bf16.msra.mxu0 0
        %739 = vmatprep.subr.bf16.mxu0 0
        %740 = vmatpush1.bf16.msra.mxu0 0
        %741 = vmatprep.subr.bf16.mxu0 0
        %742 = vmatpush1.bf16.msra.mxu0 0
        %743 = vmatprep.subr.bf16.mxu0 0
        %744 = vmatpush1.bf16.msra.mxu0 0
        %745 = vmatprep.mubr.bf16.mxu0 0
        %746 = vmatmul.mubr.bf16.gmra.mrb[0].mxu0 %v595
        %v747 = vpop.f32.mrb[0].mxu0
        %v748 = vadd.f32 0.0, %v747
        %v749 = vpop.f32.mrb[0].mxu0
        %v750 = vpop.f32.mrb[0].mxu0
        %v751 = vadd.f32 0.0, %v750
        %v752 = vpop.f32.mrb[0].mxu0
        %753 = vdwg.mxu0
        %v754 = vpack.c.bf16 %v638, %v638
        %v755 = vpack.c.bf16 %v639, %v639
        %v756 = vpack.c.bf16 %v691, %v691
        %v757 = vpack.c.bf16 %v694, %v694
        %v759 = vsel %vm593, %v754, 0
        %v762 = vsel %vm593, %v756, 0
        %764 = vmatprep.subr.bf16.mxu0 0
        %765 = vmatpush1.bf16.xpose.msra.mxu0 %v762
        %766 = vmatprep.subr.bf16.mxu0 0
        %767 = vmatpush1.bf16.xpose.msra.mxu0 0
        %768 = vmatprep.subr.bf16.mxu0 0
        %769 = vmatpush1.bf16.xpose.msra.mxu0 0
        %770 = vmatprep.subr.bf16.mxu0 0
        %771 = vmatpush1.bf16.xpose.msra.mxu0 0
        %772 = vmatprep.subr.bf16.mxu0 0
        %773 = vmatpush1.bf16.xpose.msra.mxu0 0
        %774 = vmatprep.subr.bf16.mxu0 0
        %775 = vmatpush1.bf16.xpose.msra.mxu0 0
        %776 = vmatprep.subr.bf16.mxu0 0
        %777 = vmatpush1.bf16.xpose.msra.mxu0 0
        %778 = vmatprep.subr.bf16.mxu0 0
        %779 = vmatpush1.bf16.xpose.msra.mxu0 0
        %780 = vmatprep.subr.bf16.mxu0 0
        %781 = vmatpush1.bf16.xpose.msra.mxu0 0
        %782 = vmatprep.subr.bf16.mxu0 0
        %783 = vmatpush1.bf16.xpose.msra.mxu0 0
        %784 = vmatprep.subr.bf16.mxu0 0
        %785 = vmatpush1.bf16.xpose.msra.mxu0 0
        %786 = vmatprep.subr.bf16.mxu0 0
        %787 = vmatpush1.bf16.xpose.msra.mxu0 0
        %788 = vmatprep.subr.bf16.mxu0 0
        %789 = vmatpush1.bf16.xpose.msra.mxu0 0
        %790 = vmatprep.subr.bf16.mxu0 0
        %791 = vmatpush1.bf16.xpose.msra.mxu0 0
        %792 = vmatprep.subr.bf16.mxu0 0
        %793 = vmatpush1.bf16.xpose.msra.mxu0 0
        %794 = vmatprep.subr.bf16.mxu0 0
        %795 = vmatpush1.bf16.xpose.msra.mxu0 0
        %796 = vmatprep.mubr.bf16.mxu0 0
        %797 = vmatmul.mubr.bf16.gmra.mrb[0].mxu0 %v759
        %v798 = vpop.f32.mrb[0].mxu0
        %v799 = vadd.f32 0.0, %v798
        %v800 = vpop.f32.mrb[0].mxu0
        %v801 = vpop.f32.mrb[0].mxu0
        %v802 = vpop.f32.mrb[0].mxu0
        %803 = vdwg.mxu0
        %v805 = vsel %vm593, %v755, 0
        %v808 = vsel %vm593, %v757, 0
        %810 = vmatprep.subr.bf16.mxu0 0
        %811 = vmatpush1.bf16.xpose.msra.mxu0 %v808
        %812 = vmatprep.subr.bf16.mxu0 0
        %813 = vmatpush1.bf16.xpose.msra.mxu0 0
        %814 = vmatprep.subr.bf16.mxu0 0
        %815 = vmatpush1.bf16.xpose.msra.mxu0 0
        %816 = vmatprep.subr.bf16.mxu0 0
        %817 = vmatpush1.bf16.xpose.msra.mxu0 0
        %818 = vmatprep.subr.bf16.mxu0 0
        %819 = vmatpush1.bf16.xpose.msra.mxu0 0
        %820 = vmatprep.subr.bf16.mxu0 0
        %821 = vmatpush1.bf16.xpose.msra.mxu0 0
        %822 = vmatprep.subr.bf16.mxu0 0
        %823 = vmatpush1.bf16.xpose.msra.mxu0 0
        %824 = vmatprep.subr.bf16.mxu0 0
        %825 = vmatpush1.bf16.xpose.msra.mxu0 0
        %826 = vmatprep.subr.bf16.mxu0 0
        %827 = vmatpush1.bf16.xpose.msra.mxu0 0
        %828 = vmatprep.subr.bf16.mxu0 0
        %829 = vmatpush1.bf16.xpose.msra.mxu0 0
        %830 = vmatprep.subr.bf16.mxu0 0
        %831 = vmatpush1.bf16.xpose.msra.mxu0 0
        %832 = vmatprep.subr.bf16.mxu0 0
        %833 = vmatpush1.bf16.xpose.msra.mxu0 0
        %834 = vmatprep.subr.bf16.mxu0 0
        %835 = vmatpush1.bf16.xpose.msra.mxu0 0
        %836 = vmatprep.subr.bf16.mxu0 0
        %837 = vmatpush1.bf16.xpose.msra.mxu0 0
        %838 = vmatprep.subr.bf16.mxu0 0
        %839 = vmatpush1.bf16.xpose.msra.mxu0 0
        %840 = vmatprep.subr.bf16.mxu0 0
        %841 = vmatpush1.bf16.xpose.msra.mxu0 0
        %842 = vmatprep.mubr.bf16.mxu0 0
        %843 = vmatmul.mubr.bf16.gmra.mrb[0].mxu0 %v805
        %v844 = vpop.f32.mrb[0].mxu0
        %v845 = vadd.f32 0.0, %v844
        %v846 = vpop.f32.mrb[0].mxu0
        %v847 = vpop.f32.mrb[0].mxu0
        %v848 = vpop.f32.mrb[0].mxu0
        %849 = vdwg.mxu0
        %vm850 = vcmask 64512
        %v851 = vsel %vm850, %v799, -inf
        %852 = vmax.xlane.f32.xlu0 %v851
        %v853 = vpop.xlane.xlu0 %852
        %v854 = vsel %vm850, %v845, -inf
        %855 = vmax.xlane.f32.xlu0 %v854
        %v856 = vpop.xlane.xlu0 %855
        %v857 = vsub.f32 %v799, %v853
        %v858 = vsub.f32 %v845, %v856
        %v859 = vmul.f32 %v857, 1.442695
        %v860 = vpow.pop %v859
        %v861 = vmul.f32 %v858, 1.442695
        %v862 = vpow.pop %v861
        %v863 = vsel %vm850, %v860, 0.0
        %864 = vadd.xlane.f32.xlu0 %v863
        %v865 = vpop.xlane.xlu0 %864
        %v866 = vsel %vm850, %v862, 0.0
        %867 = vadd.xlane.f32.xlu0 %v866
        %v868 = vpop.xlane.xlu0 %867
        %v869 = vrcp.pop %v865
        %v870 = vrcp.pop %v868
        %v871 = vmul.f32 %v860, %v869
        %v872 = vmul.f32 %v862, %v870
        %v873 = vpack.c.bf16 %v871, %v871
        %v874 = vpack.c.bf16 %v872, %v872
        %v875 = vpack.c.bf16 %v748, %v748
        %v876 = vpack.c.bf16 %v751, %v751
        %v878 = vsel %vm850, %v873, 0
        %vm880 = vcmask 1043456
        %v882 = vsel %vm880, %v875, 0
        %884 = vmatprep.subr.bf16.mxu0 0
        %885 = vmatpush1.bf16.msra.mxu0 %v882
        %886 = vmatprep.subr.bf16.mxu0 0
        %887 = vmatpush1.bf16.msra.mxu0 0
        %888 = vmatprep.subr.bf16.mxu0 0
        %889 = vmatpush1.bf16.msra.mxu0 0
        %890 = vmatprep.subr.bf16.mxu0 0
        %891 = vmatpush1.bf16.msra.mxu0 0
        %892 = vmatprep.subr.bf16.mxu0 0
        %893 = vmatpush1.bf16.msra.mxu0 0
        %894 = vmatprep.subr.bf16.mxu0 0
        %895 = vmatpush1.bf16.msra.mxu0 0
        %896 = vmatprep.subr.bf16.mxu0 0
        %897 = vmatpush1.bf16.msra.mxu0 0
        %898 = vmatprep.subr.bf16.mxu0 0
        %899 = vmatpush1.bf16.msra.mxu0 0
        %900 = vmatprep.subr.bf16.mxu0 0
        %901 = vmatpush1.bf16.msra.mxu0 0
        %902 = vmatprep.subr.bf16.mxu0 0
        %903 = vmatpush1.bf16.msra.mxu0 0
        %904 = vmatprep.subr.bf16.mxu0 0
        %905 = vmatpush1.bf16.msra.mxu0 0
        %906 = vmatprep.subr.bf16.mxu0 0
        %907 = vmatpush1.bf16.msra.mxu0 0
        %908 = vmatprep.subr.bf16.mxu0 0
        %909 = vmatpush1.bf16.msra.mxu0 0
        %910 = vmatprep.subr.bf16.mxu0 0
        %911 = vmatpush1.bf16.msra.mxu0 0
        %912 = vmatprep.subr.bf16.mxu0 0
        %913 = vmatpush1.bf16.msra.mxu0 0
        %914 = vmatprep.subr.bf16.mxu0 0
        %915 = vmatpush1.bf16.msra.mxu0 0
        %916 = vmatprep.mubr.bf16.mxu0 0
        %917 = vmatmul.mubr.bf16.gmra.mrb[0].mxu0 %v878
        %v918 = vpop.f32.mrb[0].mxu0
        %v919 = vadd.f32 0.0, %v918
        %v920 = vpop.f32.mrb[0].mxu0
        %v921 = vpop.f32.mrb[0].mxu0
        %v922 = vpop.f32.mrb[0].mxu0
        %923 = vdwg.mxu0
        %v925 = vsel %vm850, %v874, 0
        %v928 = vsel %vm880, %v876, 0
        %930 = vmatprep.subr.bf16.mxu0 0
        %931 = vmatpush1.bf16.msra.mxu0 %v928
        %932 = vmatprep.subr.bf16.mxu0 0
        %933 = vmatpush1.bf16.msra.mxu0 0
        %934 = vmatprep.subr.bf16.mxu0 0
        %935 = vmatpush1.bf16.msra.mxu0 0
        %936 = vmatprep.subr.bf16.mxu0 0
        %937 = vmatpush1.bf16.msra.mxu0 0
        %938 = vmatprep.subr.bf16.mxu0 0
        %939 = vmatpush1.bf16.msra.mxu0 0
        %940 = vmatprep.subr.bf16.mxu0 0
        %941 = vmatpush1.bf16.msra.mxu0 0
        %942 = vmatprep.subr.bf16.mxu0 0
        %943 = vmatpush1.bf16.msra.mxu0 0
        %944 = vmatprep.subr.bf16.mxu0 0
        %945 = vmatpush1.bf16.msra.mxu0 0
        %946 = vmatprep.subr.bf16.mxu0 0
        %947 = vmatpush1.bf16.msra.mxu0 0
        %948 = vmatprep.subr.bf16.mxu0 0
        %949 = vmatpush1.bf16.msra.mxu0 0
        %950 = vmatprep.subr.bf16.mxu0 0
        %951 = vmatpush1.bf16.msra.mxu0 0
        %952 = vmatprep.subr.bf16.mxu0 0
        %953 = vmatpush1.bf16.msra.mxu0 0
        %954 = vmatprep.subr.bf16.mxu0 0
        %955 = vmatpush1.bf16.msra.mxu0 0
        %956 = vmatprep.subr.bf16.mxu0 0
        %957 = vmatpush1.bf16.msra.mxu0 0
        %958 = vmatprep.subr.bf16.mxu0 0
        %959 = vmatpush1.bf16.msra.mxu0 0
        %960 = vmatprep.subr.bf16.mxu0 0
        %961 = vmatpush1.bf16.msra.mxu0 0
        %962 = vmatprep.mubr.bf16.mxu0 0
        %963 = vmatmul.mubr.bf16.gmra.mrb[0].mxu0 %v925
        %v964 = vpop.f32.mrb[0].mxu0
        %v965 = vadd.f32 0.0, %v964
        %v966 = vpop.f32.mrb[0].mxu0
        %v967 = vpop.f32.mrb[0].mxu0
        %v968 = vpop.f32.mrb[0].mxu0
        %969 = vdwg.mxu0
        %v970 = vadd.f32 %v919, %v574
        %v971 = vadd.f32 %v965, %v575
        %v972 = vld [vmem:[%s538] sm:$0x1]
        %v973 = vld [vmem:[%s541] sm:$0x1]
        %v974 = vsel %vm593, %v970, 0.0
        %975 = vadd.xlane.f32.xlu0 %v974
        %v976 = vpop.xlane.xlu0 %975
        %v977 = vsel %vm593, %v971, 0.0
        %978 = vadd.xlane.f32.xlu0 %v977
        %v979 = vpop.xlane.xlu0 %978
        %v980 = vrcp.pop 32.0
        %v981 = vmul.f32 %v976, %v980
        %v982 = vmul.f32 %v979, %v980
        %v983 = vsub.f32 %v970, %v981
        %v984 = vsub.f32 %v971, %v982
        %v985 = vmul.f32 %v983, %v983
        %v986 = vmul.f32 %v984, %v984
        %v987 = vsel %vm593, %v985, 0.0
        %988 = vadd.xlane.f32.xlu0 %v987
        %v989 = vpop.xlane.xlu0 %988
        %v990 = vsel %vm593, %v986, 0.0
        %991 = vadd.xlane.f32.xlu0 %v990
        %v992 = vpop.xlane.xlu0 %991
        %v993 = vmul.f32 %v989, %v980
        %v994 = vmul.f32 %v992, %v980
        %v995 = vadd.f32 %v993, 1e-05
        %v996 = vadd.f32 %v994, 1e-05
        %v997 = vrsqrt.pop %v995
        %v998 = vrsqrt.pop %v996
        %v999 = vmul.f32 %v983, %v997
        %v1000 = vmul.f32 %v984, %v998
        %v1002 = vlaneseq
        %v1003 = vshrl.u32 %v1002, 7
        %v1004 = vsub.s32 0, %v1003
        %v1005 = vrot.slane %v972, %v1004
        %v1007 = vmul.f32 %v999, %v1005
        %v1008 = vmul.f32 %v1000, %v1005
        %v1010 = vlaneseq
        %v1011 = vshrl.u32 %v1010, 7
        %v1012 = vsub.s32 0, %v1011
        %v1013 = vrot.slane %v973, %v1012
        %v1015 = vadd.f32 %v1007, %v1013
        %v1016 = vadd.f32 %v1008, %v1013
        %v1017 = vpack.c.bf16 %v1016, %v1015
        %v1018 = vld [vmem:[%s546] sm:$0xf]
        %v1019 = vld [vmem:[%s546 + $0x4] sm:$0xf]
        %v1020 = vld [vmem:[%s546 + $0x8] sm:$0xf]
        %v1021 = vld [vmem:[%s546 + $0xc] sm:$0xf]
        %v1022 = vld [vmem:[%s549] sm:$0x1]
        %v1024 = vlaneseq
        %v1025 = vshrl.u32 %v1024, 7
        %v1026 = vsub.s32 0, %v1025
        %v1027 = vrot.slane %v1022, %v1026
        %v1033 = vunpack.c.l.b16 %v1018
        %v1034 = vunpack.c.l.b16 %v1019
        %v1035 = vunpack.c.l.b16 %v1020
        %v1036 = vunpack.c.l.b16 %v1021
        %v1037 = vpack.c.b16 %v1034, %v1033
        %v1038 = vpack.c.b16 %v1036, %v1035
        %v1042 = vsel %vm593, %v1017, 0
        %1044 = vmatprep.subr.bf16.mxu0 0
        %1045 = vmatpush1.bf16.msra.mxu0 %v1037
        %1046 = vmatprep.subr.bf16.mxu0 0
        %1047 = vmatpush1.bf16.msra.mxu0 %v1038
        %1048 = vmatprep.subr.bf16.mxu0 0
        %1049 = vmatpush1.bf16.msra.mxu0 0
        %1050 = vmatprep.subr.bf16.mxu0 0
        %1051 = vmatpush1.bf16.msra.mxu0 0
        %1052 = vmatprep.subr.bf16.mxu0 0
        %1053 = vmatpush1.bf16.msra.mxu0 0
        %1054 = vmatprep.subr.bf16.mxu0 0
        %1055 = vmatpush1.bf16.msra.mxu0 0
        %1056 = vmatprep.subr.bf16.mxu0 0
        %1057 = vmatpush1.bf16.msra.mxu0 0
        %1058 = vmatprep.subr.bf16.mxu0 0
        %1059 = vmatpush1.bf16.msra.mxu0 0
        %1060 = vmatprep.subr.bf16.mxu0 0
        %1061 = vmatpush1.bf16.msra.mxu0 0
        %1062 = vmatprep.subr.bf16.mxu0 0
        %1063 = vmatpush1.bf16.msra.mxu0 0
        %1064 = vmatprep.subr.bf16.mxu0 0
        %1065 = vmatpush1.bf16.msra.mxu0 0
        %1066 = vmatprep.subr.bf16.mxu0 0
        %1067 = vmatpush1.bf16.msra.mxu0 0
        %1068 = vmatprep.subr.bf16.mxu0 0
        %1069 = vmatpush1.bf16.msra.mxu0 0
        %1070 = vmatprep.subr.bf16.mxu0 0
        %1071 = vmatpush1.bf16.msra.mxu0 0
        %1072 = vmatprep.subr.bf16.mxu0 0
        %1073 = vmatpush1.bf16.msra.mxu0 0
        %1074 = vmatprep.subr.bf16.mxu0 0
        %1075 = vmatpush1.bf16.msra.mxu0 0
        %1076 = vmatprep.mubr.bf16.mxu0 0
        %1077 = vmatmul.mubr.bf16.gmra.mrb[0].mxu0 %v1042
        %v1078 = vpop.f32.mrb[0].mxu0
        %v1079 = vadd.f32 %v1027, %v1078
        %v1080 = vpop.f32.mrb[0].mxu0
        %v1081 = vpop.f32.mrb[0].mxu0
        %v1082 = vadd.f32 %v1027, %v1081
        %v1083 = vpop.f32.mrb[0].mxu0
        %1084 = vdwg.mxu0
        %v1085 = vmax.f32 %v1079, 0.0
        %v1086 = vmax.f32 %v1082, 0.0
        %v1087 = vpack.c.bf16 %v1086, %v1085
        %v1088 = vld [vmem:[%s554] sm:$0xf]
        %v1089 = vld [vmem:[%s554 + $0x4] sm:$0xf]
        %v1090 = vld [vmem:[%s554 + $0x8] sm:$0xf]
        %v1091 = vld [vmem:[%s554 + $0xc] sm:$0xf]
        %v1092 = vld [vmem:[%s554 + $0x10] sm:$0xf]
        %v1093 = vld [vmem:[%s554 + $0x14] sm:$0xf]
        %v1094 = vld [vmem:[%s554 + $0x18] sm:$0xf]
        %v1095 = vld [vmem:[%s554 + $0x1c] sm:$0xf]
        %v1096 = vld [vmem:[%s554 + $0x20] sm:$0xf]
        %v1097 = vld [vmem:[%s554 + $0x24] sm:$0xf]
        %v1098 = vld [vmem:[%s554 + $0x28] sm:$0xf]
        %v1099 = vld [vmem:[%s554 + $0x2c] sm:$0xf]
        %v1100 = vld [vmem:[%s554 + $0x30] sm:$0xf]
        %v1101 = vld [vmem:[%s554 + $0x34] sm:$0xf]
        %v1102 = vld [vmem:[%s554 + $0x38] sm:$0xf]
        %v1103 = vld [vmem:[%s554 + $0x3c] sm:$0xf]
        %v1104 = vld [vmem:[%s557] sm:$0x1]
        %v1106 = vlaneseq
        %v1107 = vshrl.u32 %v1106, 7
        %v1108 = vsub.s32 0, %v1107
        %v1109 = vrot.slane %v1104, %v1108
        %v1127 = vunpack.c.l.b16 %v1088
        %v1128 = vunpack.c.l.b16 %v1089
        %v1129 = vunpack.c.l.b16 %v1090
        %v1130 = vunpack.c.l.b16 %v1091
        %v1131 = vunpack.c.l.b16 %v1092
        %v1132 = vunpack.c.l.b16 %v1093
        %v1133 = vunpack.c.l.b16 %v1094
        %v1134 = vunpack.c.l.b16 %v1095
        %v1135 = vunpack.c.l.b16 %v1096
        %v1136 = vunpack.c.l.b16 %v1097
        %v1137 = vunpack.c.l.b16 %v1098
        %v1138 = vunpack.c.l.b16 %v1099
        %v1139 = vunpack.c.l.b16 %v1100
        %v1140 = vunpack.c.l.b16 %v1101
        %v1141 = vunpack.c.l.b16 %v1102
        %v1142 = vunpack.c.l.b16 %v1103
        %v1143 = vpack.c.b16 %v1128, %v1127
        %v1144 = vpack.c.b16 %v1130, %v1129
        %v1145 = vpack.c.b16 %v1132, %v1131
        %v1146 = vpack.c.b16 %v1134, %v1133
        %v1147 = vpack.c.b16 %v1136, %v1135
        %v1148 = vpack.c.b16 %v1138, %v1137
        %v1149 = vpack.c.b16 %v1140, %v1139
        %v1150 = vpack.c.b16 %v1142, %v1141
        %1159 = vmatprep.subr.bf16.mxu0 0
        %1160 = vmatpush1.bf16.msra.mxu0 %v1143
        %1161 = vmatprep.subr.bf16.mxu0 0
        %1162 = vmatpush1.bf16.msra.mxu0 %v1144
        %1163 = vmatprep.subr.bf16.mxu0 0
        %1164 = vmatpush1.bf16.msra.mxu0 %v1145
        %1165 = vmatprep.subr.bf16.mxu0 0
        %1166 = vmatpush1.bf16.msra.mxu0 %v1146
        %1167 = vmatprep.subr.bf16.mxu0 0
        %1168 = vmatpush1.bf16.msra.mxu0 %v1147
        %1169 = vmatprep.subr.bf16.mxu0 0
        %1170 = vmatpush1.bf16.msra.mxu0 %v1148
        %1171 = vmatprep.subr.bf16.mxu0 0
        %1172 = vmatpush1.bf16.msra.mxu0 %v1149
        %1173 = vmatprep.subr.bf16.mxu0 0
        %1174 = vmatpush1.bf16.msra.mxu0 %v1150
        %1175 = vmatprep.subr.bf16.mxu0 0
        %1176 = vmatpush1.bf16.msra.mxu0 0
        %1177 = vmatprep.subr.bf16.mxu0 0
        %1178 = vmatpush1.bf16.msra.mxu0 0
        %1179 = vmatprep.subr.bf16.mxu0 0
        %1180 = vmatpush1.bf16.msra.mxu0 0
        %1181 = vmatprep.subr.bf16.mxu0 0
        %1182 = vmatpush1.bf16.msra.mxu0 0
        %1183 = vmatprep.subr.bf16.mxu0 0
        %1184 = vmatpush1.bf16.msra.mxu0 0
        %1185 = vmatprep.subr.bf16.mxu0 0
        %1186 = vmatpush1.bf16.msra.mxu0 0
        %1187 = vmatprep.subr.bf16.mxu0 0
        %1188 = vmatpush1.bf16.msra.mxu0 0
        %1189 = vmatprep.subr.bf16.mxu0 0
        %1190 = vmatpush1.bf16.msra.mxu0 0
        %1191 = vmatprep.mubr.bf16.mxu0 0
        %1192 = vmatmul.mubr.bf16.gmra.mrb[0].mxu0 %v1087
        %v1193 = vpop.f32.mrb[0].mxu0
        %v1194 = vadd.f32 %v1109, %v1193
        %v1195 = vpop.f32.mrb[0].mxu0
        %v1196 = vpop.f32.mrb[0].mxu0
        %v1197 = vadd.f32 %v1109, %v1196
        %v1198 = vpop.f32.mrb[0].mxu0
        %1199 = vdwg.mxu0
        %v1200 = vadd.f32 %v1194, %v1015
        %v1201 = vadd.f32 %v1197, %v1016
        %v1202 = vld [vmem:[%s560] sm:$0x1]
        %v1203 = vld [vmem:[%s563] sm:$0x1]
        %v1204 = vsel %vm593, %v1200, 0.0
        %1205 = vadd.xlane.f32.xlu0 %v1204
        %v1206 = vpop.xlane.xlu0 %1205
        %v1207 = vsel %vm593, %v1201, 0.0
        %1208 = vadd.xlane.f32.xlu0 %v1207
        %v1209 = vpop.xlane.xlu0 %1208
        %v1210 = vmul.f32 %v1206, %v980
        %v1211 = vmul.f32 %v1209, %v980
        %v1212 = vsub.f32 %v1200, %v1210
        %v1213 = vsub.f32 %v1201, %v1211
        %v1214 = vmul.f32 %v1212, %v1212
        %v1215 = vmul.f32 %v1213, %v1213
        %v1216 = vsel %vm593, %v1214, 0.0
        %1217 = vadd.xlane.f32.xlu0 %v1216
        %v1218 = vpop.xlane.xlu0 %1217
        %v1219 = vsel %vm593, %v1215, 0.0
        %1220 = vadd.xlane.f32.xlu0 %v1219
        %v1221 = vpop.xlane.xlu0 %1220
        %v1222 = vmul.f32 %v1218, %v980
        %v1223 = vmul.f32 %v1221, %v980
        %v1224 = vadd.f32 %v1222, 1e-05
        %v1225 = vadd.f32 %v1223, 1e-05
        %v1226 = vrsqrt.pop %v1224
        %v1227 = vrsqrt.pop %v1225
        %v1228 = vmul.f32 %v1212, %v1226
        %v1229 = vmul.f32 %v1213, %v1227
        %v1231 = vlaneseq
        %v1232 = vshrl.u32 %v1231, 7
        %v1233 = vsub.s32 0, %v1232
        %v1234 = vrot.slane %v1202, %v1233
        %v1236 = vmul.f32 %v1228, %v1234
        %v1237 = vmul.f32 %v1229, %v1234
        %v1239 = vlaneseq
        %v1240 = vshrl.u32 %v1239, 7
        %v1241 = vsub.s32 0, %v1240
        %v1242 = vrot.slane %v1203, %v1241
        %v1244 = vadd.f32 %v1236, %v1242
        %v1245 = vadd.f32 %v1237, %v1242
        %1246 = vst.msk [vmem:[#allocation2] sm:$0xff] %vm593, %v1244
        %1247 = vst.msk [vmem:[#allocation2 + $0x8] sm:$0xff] %vm593, %v1245
        %p1248 = scmp.eq.s32.totalorder %s24, 1
        // Predicated region
        $region73: #{encoder_forward.1} parent=67 // pred_check
          %p1249 = pneg %p1248
        $region74: #{encoder_forward.1} parent=67 // pred_check_branch
          %1251 = sbr.rel (%p1249) target = $region76
        $region75: #{encoder_forward.1} parent=67 // pred_region
          %v1252 = vld [vmem:[#allocation2] sm:$0xff]
          %v1253 = vld [vmem:[#allocation2 + $0x8] sm:$0xff]
          %1254 = vst.msk [vmem:[#allocation3] sm:$0xff] %vm593, %v1252
          %1255 = vst.msk [vmem:[#allocation3 + $0x8] sm:$0xff] %vm593, %v1253
        $region76: #{encoder_forward.1} parent=67 // pred_fallthru
          _
        // Predicated region
        $region77: #{encoder_forward.1} parent=67 // pred_check
          %p1256 = pneg %p344
        $region78: #{encoder_forward.1} parent=67 // pred_check_branch
          %1258 = sbr.rel (%p1256) target = $region80
        $region79: #{encoder_forward.1} parent=67 // pred_region
          %s1260 = ssub.s32 256, 256
          %1261 = vsyncadd [#allocation4], %s1260
          %s1262 = sshll.u32 [#allocation3], 4
          %s1263 = int_to_ptr.vmem [resolvable:$true] %s1262
          %1268 = dma.vmem_to_hbm [thread:$0]  %s1263, 256, %s12, [#allocation4], 128, 128, 8
        $region80: #{encoder_forward.1} parent=67 // pred_fallthru
          _
        // Predicated region
        $region81: #{encoder_forward.1} parent=67 // pred_check
          %p1269 = pneg %p344
        $region82: #{encoder_forward.1} parent=67 // pred_check_branch
          %1271 = sbr.rel (%p1269) target = $region84
        $region83: #{encoder_forward.1} parent=67 // pred_region
          %1272 = dma.done [#allocation4], 256
        $region84: #{encoder_forward.1} parent=67 // pred_fallthru
          _
      $region68: #{encoder_forward.1} parent=5 // pred_fallthru
        _
      %p1273 = scmp.le.s32.totalorder 2, %s19
      // Predicated region
      $region85: #{encoder_forward.1} parent=5 // pred_check
        %p1274 = pneg %p1273
      $region86: #{encoder_forward.1} parent=5 // pred_check_branch
        %1276 = sbr.rel (%p1274) target = $region88
      $region87: #{encoder_forward.1} parent=5 // pred_region
        %s1277 = ssub.s32 %s19, 2
      $region88: #{encoder_forward.1} parent=5 // pred_fallthru
        _
    $region6: #{encoder_forward.1} parent=1 // loop_footer
      %s23 = sadd.s32 1, %s19
    $region7: #{encoder_forward.1} parent=1 // loop_footer_branch
      %18 = sbr.rel target = $region3
    $region8: #{encoder_forward.1} parent=1 // loop_exit
      _
    %1278 = vsyncpa [#allocation4], 1
    %s1279 = scalar_lea.sflag [#allocation4], 1
    %1280 = vsyncpa %s1279, 1

</llo_original>
